<compile_context>
chip_gen: v7x
topology: tpu7x:2x2x1
jax: 0.10.0
libtpu: 0.0.40
codegen_flags: <defaults>
</compile_context>

<pallas_src>
import functools

import jax
import jax.numpy as jnp
from jax import lax
from jax.experimental import pallas as pl
from jax.experimental.pallas import tpu as pltpu


def _silu(v):
    # f32 SiLU; approx reciprocal runs on the otherwise-idle EUP slot (error
    # ~1e-3 relative, well inside the bf16-matmul tolerance budget).
    return v * pl.reciprocal(1.0 + jnp.exp(-v), approx=True)


# ---------------------------------------------------------------------------
# Kernel: one lane-strip (G whole images x HWpad padded lanes) of DPRC.
#
#   x_ref   : (C1, TN)      input, channels on sublanes (f32)
#   w12_ref : (2*C_, C1)    cv1|cv2 1x1 weights, BN scale folded (bf16)
#   b12_ref : (2*C_, 1)     folded BN bias (f32)
#   w34_ref : (2*C2h, 9*C_) cv3|cv4 3x3 weights, branch-major rows,
#                           tap-major im2col columns (bf16)
#   b34_ref : (2*C2h, 1)    folded BN bias (f32)
#   out_ref : (2*C2h, TN)   output, already in torch.cat((x3, x4), 1) order
#   z_ref   : (2*C_, TN)    f32 scratch, post-residual cv1|cv2 activations
#   big_ref : (18*C_, TN) bf16 im2col scratch      if use_patch
#             (2*C2h, TN) f32 conv accumulator     otherwise
# ---------------------------------------------------------------------------
def dprc_kernel(x_ref, w12_ref, b12_ref, w34_ref, b34_ref, out_ref,
                z_ref, big_ref, *, H, W, HWpad, C_, C2h, use_patch):
    TN = x_ref.shape[1]

    xf = x_ref[...].astype(jnp.float32)                      # (C1, TN)
    xb = xf.astype(jnp.bfloat16)

    # ---- cv1 & cv2 (1x1 conv + BN + SiLU), one fused bf16 MXU matmul -------
    a = _silu(jnp.dot(w12_ref[...], xb, preferred_element_type=jnp.float32)
              + b12_ref[...])                                # (2*C_, TN) f32

    # Residual adds (module requires C_ == C1).  Written back to VMEM so the
    # 9-tap loop re-loads slices instead of holding them in vregs throughout.
    z_ref[pl.ds(0, C_), :] = a[:C_, :] + xf
    z_ref[pl.ds(C_, C_), :] = a[C_:, :] + xf

    # ---- 3x3 'same' conv taps via lane rolls + per-image border masks ------
    # Masks depend only on the lane index: build once at sublane-height 1 and
    # let jnp.where broadcast them across channels.  q = index inside one
    # padded image, so wrap across image/pad boundaries is always masked.
    q = lax.broadcasted_iota(jnp.int32, (1, TN), 1) % HWpad
    col = q % W
    top_ok = q >= W
    bot_ok = q < (H - 1) * W
    lft_ok = col >= 1
    rgt_ok = col <= W - 2

    def for_each_tap(consume):
        tap = 0
        for dh in (-1, 0, 1):
            for dw in (-1, 0, 1):
                d = dh * W + dw                      # out[p] = z[p + d]
                conds = []
                if dh == -1:
                    conds.append(top_ok)
                elif dh == 1:
                    conds.append(bot_ok)
                if dw == -1:
                    conds.append(lft_ok)
                elif dw == 1:
                    conds.append(rgt_ok)
                z1 = z_ref[pl.ds(0, C_), :]
                z2 = z_ref[pl.ds(C_, C_), :]
                if d != 0:
                    s = (-d) % TN
                    z1 = pltpu.roll(z1, s, axis=1)
                    z2 = pltpu.roll(z2, s, axis=1)
                if conds:
                    m = conds[0]
                    for c in conds[1:]:
                        m = m & c
                    z1 = jnp.where(m, z1, 0.0)
                    z2 = jnp.where(m, z2, 0.0)
                consume(tap, z1.astype(jnp.bfloat16), z2.astype(jnp.bfloat16))
                tap += 1

    if use_patch:
        # Small C_: materialize a branch-major bf16 im2col buffer and run two
        # dense matmuls (no zero block-diagonal, half the old patch bytes).
        def stash(tap, t1, t2):
            big_ref[pl.ds(tap * C_, C_), :] = t1
            big_ref[pl.ds(9 * C_ + tap * C_, C_), :] = t2

        for_each_tap(stash)
        o1 = jnp.dot(w34_ref[pl.ds(0, C2h), :], big_ref[pl.ds(0, 9 * C_), :],
                     preferred_element_type=jnp.float32)
        o2 = jnp.dot(w34_ref[pl.ds(C2h, C2h), :], big_ref[pl.ds(9 * C_, 9 * C_), :],
                     preferred_element_type=jnp.float32)
        out_ref[pl.ds(0, C2h), :] = _silu(
            o1 + b34_ref[pl.ds(0, C2h), :]).astype(out_ref.dtype)
        out_ref[pl.ds(C2h, C2h), :] = _silu(
            o2 + b34_ref[pl.ds(C2h, C2h), :]).astype(out_ref.dtype)
    else:
        # Large C_ (>= 128): skip the im2col buffer, accumulate 9 per-tap
        # matmuls (K = C_ already fills the MXU K dimension).
        big_ref[...] = jnp.zeros_like(big_ref)

        def accumulate(tap, t1, t2):
            wk = pl.ds(tap * C_, C_)
            big_ref[pl.ds(0, C2h), :] += jnp.dot(
                w34_ref[pl.ds(0, C2h), wk], t1, preferred_element_type=jnp.float32)
            big_ref[pl.ds(C2h, C2h), :] += jnp.dot(
                w34_ref[pl.ds(C2h, C2h), wk], t2, preferred_element_type=jnp.float32)

        for_each_tap(accumulate)
        out_ref[pl.ds(0, C2h), :] = _silu(
            big_ref[pl.ds(0, C2h), :] + b34_ref[pl.ds(0, C2h), :]).astype(out_ref.dtype)
        out_ref[pl.ds(C2h, C2h), :] = _silu(
            big_ref[pl.ds(C2h, C2h), :] + b34_ref[pl.ds(C2h, C2h), :]).astype(out_ref.dtype)


def _round_up(x, m):
    return (x + m - 1) // m * m


# ---------------------------------------------------------------------------
# Wrapper: NCHW in / NCHW out.  Batch + padded spatial folded onto lanes.
# ---------------------------------------------------------------------------
@jax.jit
def dprc_pallas(x_nchw, params):
    B, C1, H, W = x_nchw.shape
    w1, w2, w3, w4 = params["w1"], params["w2"], params["w3"], params["w4"]
    C_ = w1.shape[0]                 # cv1/cv2 out channels
    C2h = w3.shape[0]                # cv3/cv4 out channels
    C2 = 2 * C2h
    if C_ != C1:
        raise ValueError("DPRC residual (x1 + x) requires int(c2 * e) == c1")

    HW = H * W
    HWpad = _round_up(HW, 128)       # lane-dense (unmasked) stores
    out_dtype = x_nchw.dtype

    # ---- fold BN scale into conv weights; bf16 MXU operands ----------------
    w12 = jnp.concatenate(
        [w1[:, :, 0, 0] * params["s1"][:, None],
         w2[:, :, 0, 0] * params["s2"][:, None]], axis=0).astype(jnp.bfloat16)
    b12 = jnp.concatenate([params["b1"], params["b2"]])[:, None].astype(jnp.float32)

    def im2col_weight(w, s):
        # (C2h, C_, 3, 3) OIHW -> (C2h, 9*C_): tap-major (kh*3+kw), cin minor.
        return jnp.transpose(w * s[:, None, None, None],
                             (0, 2, 3, 1)).reshape(C2h, 9 * C_)

    # Branch-major rows (cv3 block then cv4 block): two dense matmuls emit the
    # outputs directly in torch.cat((x3, x4), dim=1) order, no zero K block.
    w34 = jnp.concatenate([im2col_weight(w3, params["s3"]),
                           im2col_weight(w4, params["s4"])],
                          axis=0).astype(jnp.bfloat16)               # (C2, 9*C_)
    b34 = jnp.concatenate([params["b3"], params["b4"]])[:, None].astype(jnp.float32)

    # ---- layout: channels on sublanes, (image, padded spatial) on lanes ----
    x_cn = jnp.transpose(x_nchw, (1, 0, 2, 3)).reshape(C1, B, HW)
    x_cn = jnp.pad(x_cn, ((0, 0), (0, 0), (0, HWpad - HW)))
    x_cn = x_cn.reshape(C1, B * HWpad).astype(jnp.float32)

    # ---- choose images-per-grid-step so scratch stays v7x-VMEM-safe --------
    use_patch = C_ < 128
    bytes_per_lane = (
        2 * C_ * 4                                    # z scratch (f32)
        + (18 * C_ * 2 if use_patch else C2 * 4)      # patch (bf16) / acc (f32)
        + 2 * C1 * 4 + 2 * C2 * 4)                    # double-buffered in/out blocks
    budget = 24 * 1024 * 1024                         # headroom under v7x's 64 MiB
    G = 1
    for g in range(1, B + 1):
        if B % g == 0 and g * HWpad * bytes_per_lane <= budget:
            G = g
    TN = G * HWpad

    weight_bytes = (w12.size + w34.size) * 2 + (b12.size + b34.size) * 4
    vmem_need = TN * bytes_per_lane + 2 * weight_bytes + (1 << 20)
    vmem_limit = int(min(64 * 1024 * 1024, max(vmem_need, 16 * 1024 * 1024)))

    big_scratch = (pltpu.VMEM((18 * C_, TN), jnp.bfloat16) if use_patch
                   else pltpu.VMEM((C2, TN), jnp.float32))

    # TODO(synk): for H*W so large that one image exceeds the lane budget, add a
    # row-strip grid axis with a 1-row halo (also gives v7x a second parallel
    # axis), and single-buffer the constant weight blocks for extra VMEM headroom.
    out2d = pl.pallas_call(
        functools.partial(dprc_kernel, H=H, W=W, HWpad=HWpad,
                          C_=C_, C2h=C2h, use_patch=use_patch),
        out_shape=jax.ShapeDtypeStruct((C2, B * HWpad), out_dtype),
        grid=(B // G,),
        in_specs=[
            pl.BlockSpec((C1, TN), lambda i: (0, i)),          # x
            pl.BlockSpec((2 * C_, C1), lambda i: (0, 0)),      # w12
            pl.BlockSpec((2 * C_, 1), lambda i: (0, 0)),       # b12
            pl.BlockSpec((C2, 9 * C_), lambda i: (0, 0)),      # w34
            pl.BlockSpec((C2, 1), lambda i: (0, 0)),           # b34
        ],
        out_specs=pl.BlockSpec((C2, TN), lambda i: (0, i)),
        scratch_shapes=[pltpu.VMEM((2 * C_, TN), jnp.float32), big_scratch],
        compiler_params=pltpu.CompilerParams(
            dimension_semantics=("parallel",),
            vmem_limit_bytes=vmem_limit),
    )(x_cn, w12, b12, w34, b34)

    y = out2d.reshape(C2, B, HWpad)[:, :, :HW].reshape(C2, B, H, W)
    return jnp.transpose(y, (1, 0, 2, 3))


# ---------------------------------------------------------------------------
# Pure-JAX reference (mirrors the PyTorch module, eval-mode BN), f32.
# ---------------------------------------------------------------------------
def dprc_ref(x, params):
    def conv_bn_silu(v, w, s, b, pad):
        y = lax.conv_general_dilated(
            v, w, window_strides=(1, 1), padding=[(pad, pad), (pad, pad)],
            dimension_numbers=("NCHW", "OIHW", "NCHW"))
        y = y * s[None, :, None, None] + b[None, :, None, None]
        return y * jax.nn.sigmoid(y)

    x1 = conv_bn_silu(x, params["w1"], params["s1"], params["b1"], 0)
    x2 = conv_bn_silu(x, params["w2"], params["s2"], params["b2"], 0)
    x3 = conv_bn_silu(x1 + x, params["w3"], params["s3"], params["b3"], 1)
    x4 = conv_bn_silu(x2 + x, params["w4"], params["s4"], params["b4"], 1)
    return jnp.concatenate([x3, x4], axis=1)


def make_params(key, c1, c2, e=0.5, eps=1e-5):
    c_ = int(c2 * e)
    c2h = c2 // 2
    ks = jax.random.split(key, 4)
    w1 = jax.random.normal(ks[0], (c_, c1, 1, 1), jnp.float32) * 0.3
    w2 = jax.random.normal(ks[1], (c_, c1, 1, 1), jnp.float32) * 0.3
    w3 = jax.random.normal(ks[2], (c2h, c_, 3, 3), jnp.float32) * 0.1
    w4 = jax.random.normal(ks[3], (c2h, c_, 3, 3), jnp.float32) * 0.1

    def bn_fold(c):
        gamma = jnp.ones((c,), jnp.float32)
        beta = jnp.zeros((c,), jnp.float32)
        mean = jnp.zeros((c,), jnp.float32)
        var = jnp.ones((c,), jnp.float32)
        scale = gamma / jnp.sqrt(var + eps)
        bias = beta - mean * scale
        return scale, bias

    s1, b1 = bn_fold(c_)
    s2, b2 = bn_fold(c_)
    s3, b3 = bn_fold(c2h)
    s4, b4 = bn_fold(c2h)
    return dict(w1=w1, w2=w2, w3=w3, w4=w4,
                s1=s1, b1=b1, s2=s2, b2=b2, s3=s3, b3=b3, s4=s4, b4=b4)


if __name__ == "__main__":
    key = jax.random.PRNGKey(0)

    def run_case(k, B, C1, C2, H, W):
        kx, kp = jax.random.split(k)
        x = jax.random.normal(kx, (B, C1, H, W), jnp.float32)
        params = make_params(kp, C1, C2)
        out = jax.block_until_ready(dprc_pallas(x, params))
        ref = dprc_ref(x, params)
        assert out.shape == ref.shape, (out.shape, ref.shape)
        # bf16 MXU operands (+ approx reciprocal in SiLU) vs f32 reference.
        err = jnp.max(jnp.abs(out - ref))
        assert jnp.allclose(out, ref, atol=5e-2, rtol=5e-2), f"max abs err {err}"

    k1, k2 = jax.random.split(key)
    run_case(k1, B=2, C1=4, C2=8, H=16, W=16)   # HW already 128-aligned
    run_case(k2, B=3, C1=4, C2=8, H=12, W=12)   # exercises per-image lane padding
    print("KERNEL_OK")
</pallas_src>

<mosaic_0001>
module attributes {stable_mosaic.version = 11 : i64} {
  func.func @dprc_kernel(%arg0: i32, %arg1: memref<4x512xf32, #tpu.memory_space<vmem>>, %arg2: memref<8x4xbf16, #tpu.memory_space<vmem>>, %arg3: memref<8x1xf32, #tpu.memory_space<vmem>>, %arg4: memref<8x36xbf16, #tpu.memory_space<vmem>>, %arg5: memref<8x1xf32, #tpu.memory_space<vmem>>, %arg6: memref<8x512xf32, #tpu.memory_space<vmem>>, %arg7: memref<8x512xf32, #tpu.memory_space<vmem>>, %arg8: memref<72x512xbf16, #tpu.memory_space<vmem>>) attributes {dimension_semantics = [#tpu.dimension_semantics<parallel>], iteration_bounds = array<i64: 1>, scalar_prefetch = 0 : i64, scratch_operands = 2 : i64, tpu.core_type = #tpu.core_type<tc>, window_params = [{transform_indices = @transform_0, window_bounds = array<i64: 4, 512>}, {pipeline_mode = #tpu.pipeline_mode<synchronous>, transform_indices = @transform_1, window_bounds = array<i64: 8, 4>}, {pipeline_mode = #tpu.pipeline_mode<synchronous>, transform_indices = @transform_2, window_bounds = array<i64: 8, 1>}, {pipeline_mode = #tpu.pipeline_mode<synchronous>, transform_indices = @transform_3, window_bounds = array<i64: 8, 36>}, {pipeline_mode = #tpu.pipeline_mode<synchronous>, transform_indices = @transform_4, window_bounds = array<i64: 8, 1>}, {transform_indices = @transform_5, window_bounds = array<i64: 8, 512>}]} {
    %c0 = arith.constant 0 : index
    %c0_0 = arith.constant 0 : index
    %0 = vector.load %arg1[%c0, %c0_0] : memref<4x512xf32, #tpu.memory_space<vmem>>, vector<4x512xf32>
    %1 = arith.truncf %0 : vector<4x512xf32> to vector<4x512xbf16>
    %c0_1 = arith.constant 0 : index
    %c0_2 = arith.constant 0 : index
    %2 = vector.load %arg2[%c0_1, %c0_2] : memref<8x4xbf16, #tpu.memory_space<vmem>>, vector<8x4xbf16>
    %cst = arith.constant dense<0.000000e+00> : vector<8x512xf32>
    %3 = tpu.matmul %2, %1, %cst {dimension_numbers = #tpu.dot_dimension_numbers<[1], [0], [0], [1], [0, 0, 1, 1], [], []>} : vector<8x4xbf16>, vector<4x512xbf16>, vector<8x512xf32> -> vector<8x512xf32>
    %c0_3 = arith.constant 0 : index
    %c0_4 = arith.constant 0 : index
    %4 = vector.load %arg3[%c0_3, %c0_4] : memref<8x1xf32, #tpu.memory_space<vmem>>, vector<8x1xf32>
    %5 = vector.broadcast %4 : vector<8x1xf32> to vector<8x512xf32>
    %6 = arith.addf %3, %5 : vector<8x512xf32>
    %cst_5 = arith.constant 0.000000e+00 : f32
    %7 = vector.broadcast %cst_5 : f32 to vector<8x512xf32>
    %8 = arith.subf %7, %6 : vector<8x512xf32>
    %9 = math.exp %8 : vector<8x512xf32>
    %cst_6 = arith.constant 1.000000e+00 : f32
    %10 = vector.broadcast %cst_6 : f32 to vector<8x512xf32>
    %11 = arith.addf %10, %9 : vector<8x512xf32>
    %12 = tpu.reciprocal %11 {approx = true} : vector<8x512xf32> -> vector<8x512xf32>
    %13 = arith.mulf %6, %12 : vector<8x512xf32>
    %14 = vector.extract_strided_slice %13 {offsets = [0, 0], sizes = [4, 512], strides = [1, 1]} : vector<8x512xf32> to vector<4x512xf32>
    %15 = arith.addf %14, %0 : vector<4x512xf32>
    %c0_7 = arith.constant 0 : index
    %c0_8 = arith.constant 0 : index
    %16 = vector.load %arg7[%c0_7, %c0_8] : memref<8x512xf32, #tpu.memory_space<vmem>>, vector<4x512xf32>
    tpu.vector_store %arg7[%c0_7, %c0_8], %15 {strides = array<i32>} : memref<8x512xf32, #tpu.memory_space<vmem>>, vector<4x512xf32>,
    %17 = vector.extract_strided_slice %13 {offsets = [4, 0], sizes = [4, 512], strides = [1, 1]} : vector<8x512xf32> to vector<4x512xf32>
    %18 = arith.addf %17, %0 : vector<4x512xf32>
    %c4 = arith.constant 4 : index
    %c0_9 = arith.constant 0 : index
    %19 = vector.load %arg7[%c4, %c0_9] : memref<8x512xf32, #tpu.memory_space<vmem>>, vector<4x512xf32>
    tpu.vector_store %arg7[%c4, %c0_9], %18 {strides = array<i32>} : memref<8x512xf32, #tpu.memory_space<vmem>>, vector<4x512xf32>,
    %20 = tpu.iota {dimensions = array<i32: 1>} : vector<1x512xi32>
    %c256_i32 = arith.constant 256 : i32
    %c0_i32 = arith.constant 0 : i32
    %21 = arith.cmpi eq, %c256_i32, %c0_i32 : i32
    %c1_i32 = arith.constant 1 : i32
    %22 = arith.select %21, %c1_i32, %c256_i32 : i32
    %23 = vector.broadcast %22 : i32 to vector<1x512xi32>
    %24 = arith.remsi %20, %23 : vector<1x512xi32>
    %c0_i32_10 = arith.constant 0 : i32
    %25 = vector.broadcast %c0_i32_10 : i32 to vector<1x512xi32>
    %26 = arith.cmpi ne, %24, %25 : vector<1x512xi32>
    %c0_i32_11 = arith.constant 0 : i32
    %27 = vector.broadcast %c0_i32_11 : i32 to vector<1x512xi32>
    %28 = arith.cmpi slt, %24, %27 : vector<1x512xi32>
    %c0_i32_12 = arith.constant 0 : i32
    %29 = arith.cmpi slt, %22, %c0_i32_12 : i32
    %30 = vector.broadcast %29 : i1 to vector<1x512xi1>
    %31 = vector.broadcast %30 : vector<1x512xi1> to vector<1x512xi1>
    %32 = arith.xori %28, %31 : vector<1x512xi1>
    %33 = arith.andi %32, %26 : vector<1x512xi1>
    %34 = vector.broadcast %22 : i32 to vector<1x512xi32>
    %35 = arith.addi %24, %34 : vector<1x512xi32>
    %36 = arith.select %33, %35, %24 : vector<1x512xi1>, vector<1x512xi32>
    %c16_i32 = arith.constant 16 : i32
    %c0_i32_13 = arith.constant 0 : i32
    %37 = arith.cmpi eq, %c16_i32, %c0_i32_13 : i32
    %c1_i32_14 = arith.constant 1 : i32
    %38 = arith.select %37, %c1_i32_14, %c16_i32 : i32
    %39 = vector.broadcast %38 : i32 to vector<1x512xi32>
    %40 = arith.remsi %36, %39 : vector<1x512xi32>
    %c0_i32_15 = arith.constant 0 : i32
    %41 = vector.broadcast %c0_i32_15 : i32 to vector<1x512xi32>
    %42 = arith.cmpi ne, %40, %41 : vector<1x512xi32>
    %c0_i32_16 = arith.constant 0 : i32
    %43 = vector.broadcast %c0_i32_16 : i32 to vector<1x512xi32>
    %44 = arith.cmpi slt, %40, %43 : vector<1x512xi32>
    %c0_i32_17 = arith.constant 0 : i32
    %45 = arith.cmpi slt, %38, %c0_i32_17 : i32
    %46 = vector.broadcast %45 : i1 to vector<1x512xi1>
    %47 = vector.broadcast %46 : vector<1x512xi1> to vector<1x512xi1>
    %48 = arith.xori %44, %47 : vector<1x512xi1>
    %49 = arith.andi %48, %42 : vector<1x512xi1>
    %50 = vector.broadcast %38 : i32 to vector<1x512xi32>
    %51 = arith.addi %40, %50 : vector<1x512xi32>
    %52 = arith.select %49, %51, %40 : vector<1x512xi1>, vector<1x512xi32>
    %c16_i32_18 = arith.constant 16 : i32
    %53 = vector.broadcast %c16_i32_18 : i32 to vector<1x512xi32>
    %54 = arith.cmpi sge, %36, %53 : vector<1x512xi32>
    %c240_i32 = arith.constant 240 : i32
    %55 = vector.broadcast %c240_i32 : i32 to vector<1x512xi32>
    %56 = arith.cmpi slt, %36, %55 : vector<1x512xi32>
    %c1_i32_19 = arith.constant 1 : i32
    %57 = vector.broadcast %c1_i32_19 : i32 to vector<1x512xi32>
    %58 = arith.cmpi sge, %52, %57 : vector<1x512xi32>
    %c14_i32 = arith.constant 14 : i32
    %59 = vector.broadcast %c14_i32 : i32 to vector<1x512xi32>
    %60 = arith.cmpi sle, %52, %59 : vector<1x512xi32>
    %c0_20 = arith.constant 0 : index
    %c0_21 = arith.constant 0 : index
    %61 = vector.load %arg7[%c0_20, %c0_21] : memref<8x512xf32, #tpu.memory_space<vmem>>, vector<4x512xf32>
    %c4_22 = arith.constant 4 : index
    %c0_23 = arith.constant 0 : index
    %62 = vector.load %arg7[%c4_22, %c0_23] : memref<8x512xf32, #tpu.memory_space<vmem>>, vector<4x512xf32>
    %c17_i32 = arith.constant 17 : i32
    %63 = tpu.dynamic_rotate %61 by %c17_i32 dim 1 : vector<4x512xf32>, i32 -> vector<4x512xf32>
    %c17_i32_24 = arith.constant 17 : i32
    %64 = tpu.dynamic_rotate %62 by %c17_i32_24 dim 1 : vector<4x512xf32>, i32 -> vector<4x512xf32>
    %65 = arith.andi %54, %58 : vector<1x512xi1>
    %cst_25 = arith.constant 0.000000e+00 : f32
    %66 = vector.shape_cast %65 : vector<1x512xi1> to vector<1x512xi1>
    %67 = vector.broadcast %66 : vector<1x512xi1> to vector<4x512xi1>
    %68 = vector.broadcast %cst_25 : f32 to vector<4x512xf32>
    %69 = arith.select %67, %63, %68 : vector<4x512xi1>, vector<4x512xf32>
    %cst_26 = arith.constant 0.000000e+00 : f32
    %70 = vector.shape_cast %65 : vector<1x512xi1> to vector<1x512xi1>
    %71 = vector.broadcast %70 : vector<1x512xi1> to vector<4x512xi1>
    %72 = vector.broadcast %cst_26 : f32 to vector<4x512xf32>
    %73 = arith.select %71, %64, %72 : vector<4x512xi1>, vector<4x512xf32>
    %74 = arith.truncf %69 : vector<4x512xf32> to vector<4x512xbf16>
    %75 = arith.truncf %73 : vector<4x512xf32> to vector<4x512xbf16>
    %c0_27 = arith.constant 0 : index
    %c0_28 = arith.constant 0 : index
    %76 = vector.load %arg8[%c0_27, %c0_28] : memref<72x512xbf16, #tpu.memory_space<vmem>>, vector<4x512xbf16>
    tpu.vector_store %arg8[%c0_27, %c0_28], %74 {strides = array<i32>} : memref<72x512xbf16, #tpu.memory_space<vmem>>, vector<4x512xbf16>,
    %c36 = arith.constant 36 : index
    %c0_29 = arith.constant 0 : index
    %77 = vector.load %arg8[%c36, %c0_29] : memref<72x512xbf16, #tpu.memory_space<vmem>>, vector<4x512xbf16>
    tpu.vector_store %arg8[%c36, %c0_29], %75 {strides = array<i32>} : memref<72x512xbf16, #tpu.memory_space<vmem>>, vector<4x512xbf16>,
    %c0_30 = arith.constant 0 : index
    %c0_31 = arith.constant 0 : index
    %78 = vector.load %arg7[%c0_30, %c0_31] : memref<8x512xf32, #tpu.memory_space<vmem>>, vector<4x512xf32>
    %c4_32 = arith.constant 4 : index
    %c0_33 = arith.constant 0 : index
    %79 = vector.load %arg7[%c4_32, %c0_33] : memref<8x512xf32, #tpu.memory_space<vmem>>, vector<4x512xf32>
    %c16_i32_34 = arith.constant 16 : i32
    %80 = tpu.dynamic_rotate %78 by %c16_i32_34 dim 1 : vector<4x512xf32>, i32 -> vector<4x512xf32>
    %c16_i32_35 = arith.constant 16 : i32
    %81 = tpu.dynamic_rotate %79 by %c16_i32_35 dim 1 : vector<4x512xf32>, i32 -> vector<4x512xf32>
    %cst_36 = arith.constant 0.000000e+00 : f32
    %82 = vector.shape_cast %54 : vector<1x512xi1> to vector<1x512xi1>
    %83 = vector.broadcast %82 : vector<1x512xi1> to vector<4x512xi1>
    %84 = vector.broadcast %cst_36 : f32 to vector<4x512xf32>
    %85 = arith.select %83, %80, %84 : vector<4x512xi1>, vector<4x512xf32>
    %cst_37 = arith.constant 0.000000e+00 : f32
    %86 = vector.shape_cast %54 : vector<1x512xi1> to vector<1x512xi1>
    %87 = vector.broadcast %86 : vector<1x512xi1> to vector<4x512xi1>
    %88 = vector.broadcast %cst_37 : f32 to vector<4x512xf32>
    %89 = arith.select %87, %81, %88 : vector<4x512xi1>, vector<4x512xf32>
    %90 = arith.truncf %85 : vector<4x512xf32> to vector<4x512xbf16>
    %91 = arith.truncf %89 : vector<4x512xf32> to vector<4x512xbf16>
    %c4_38 = arith.constant 4 : index
    %c0_39 = arith.constant 0 : index
    %92 = vector.load %arg8[%c4_38, %c0_39] : memref<72x512xbf16, #tpu.memory_space<vmem>>, vector<4x512xbf16>
    tpu.vector_store %arg8[%c4_38, %c0_39], %90 {strides = array<i32>} : memref<72x512xbf16, #tpu.memory_space<vmem>>, vector<4x512xbf16>,
    %c40 = arith.constant 40 : index
    %c0_40 = arith.constant 0 : index
    %93 = vector.load %arg8[%c40, %c0_40] : memref<72x512xbf16, #tpu.memory_space<vmem>>, vector<4x512xbf16>
    tpu.vector_store %arg8[%c40, %c0_40], %91 {strides = array<i32>} : memref<72x512xbf16, #tpu.memory_space<vmem>>, vector<4x512xbf16>,
    %c0_41 = arith.constant 0 : index
    %c0_42 = arith.constant 0 : index
    %94 = vector.load %arg7[%c0_41, %c0_42] : memref<8x512xf32, #tpu.memory_space<vmem>>, vector<4x512xf32>
    %c4_43 = arith.constant 4 : index
    %c0_44 = arith.constant 0 : index
    %95 = vector.load %arg7[%c4_43, %c0_44] : memref<8x512xf32, #tpu.memory_space<vmem>>, vector<4x512xf32>
    %c15_i32 = arith.constant 15 : i32
    %96 = tpu.dynamic_rotate %94 by %c15_i32 dim 1 : vector<4x512xf32>, i32 -> vector<4x512xf32>
    %c15_i32_45 = arith.constant 15 : i32
    %97 = tpu.dynamic_rotate %95 by %c15_i32_45 dim 1 : vector<4x512xf32>, i32 -> vector<4x512xf32>
    %98 = arith.andi %54, %60 : vector<1x512xi1>
    %cst_46 = arith.constant 0.000000e+00 : f32
    %99 = vector.shape_cast %98 : vector<1x512xi1> to vector<1x512xi1>
    %100 = vector.broadcast %99 : vector<1x512xi1> to vector<4x512xi1>
    %101 = vector.broadcast %cst_46 : f32 to vector<4x512xf32>
    %102 = arith.select %100, %96, %101 : vector<4x512xi1>, vector<4x512xf32>
    %cst_47 = arith.constant 0.000000e+00 : f32
    %103 = vector.shape_cast %98 : vector<1x512xi1> to vector<1x512xi1>
    %104 = vector.broadcast %103 : vector<1x512xi1> to vector<4x512xi1>
    %105 = vector.broadcast %cst_47 : f32 to vector<4x512xf32>
    %106 = arith.select %104, %97, %105 : vector<4x512xi1>, vector<4x512xf32>
    %107 = arith.truncf %102 : vector<4x512xf32> to vector<4x512xbf16>
    %108 = arith.truncf %106 : vector<4x512xf32> to vector<4x512xbf16>
    %c8 = arith.constant 8 : index
    %c0_48 = arith.constant 0 : index
    %109 = vector.load %arg8[%c8, %c0_48] : memref<72x512xbf16, #tpu.memory_space<vmem>>, vector<4x512xbf16>
    tpu.vector_store %arg8[%c8, %c0_48], %107 {strides = array<i32>} : memref<72x512xbf16, #tpu.memory_space<vmem>>, vector<4x512xbf16>,
    %c44 = arith.constant 44 : index
    %c0_49 = arith.constant 0 : index
    %110 = vector.load %arg8[%c44, %c0_49] : memref<72x512xbf16, #tpu.memory_space<vmem>>, vector<4x512xbf16>
    tpu.vector_store %arg8[%c44, %c0_49], %108 {strides = array<i32>} : memref<72x512xbf16, #tpu.memory_space<vmem>>, vector<4x512xbf16>,
    %c0_50 = arith.constant 0 : index
    %c0_51 = arith.constant 0 : index
    %111 = vector.load %arg7[%c0_50, %c0_51] : memref<8x512xf32, #tpu.memory_space<vmem>>, vector<4x512xf32>
    %c4_52 = arith.constant 4 : index
    %c0_53 = arith.constant 0 : index
    %112 = vector.load %arg7[%c4_52, %c0_53] : memref<8x512xf32, #tpu.memory_space<vmem>>, vector<4x512xf32>
    %c1_i32_54 = arith.constant 1 : i32
    %113 = tpu.dynamic_rotate %111 by %c1_i32_54 dim 1 : vector<4x512xf32>, i32 -> vector<4x512xf32>
    %c1_i32_55 = arith.constant 1 : i32
    %114 = tpu.dynamic_rotate %112 by %c1_i32_55 dim 1 : vector<4x512xf32>, i32 -> vector<4x512xf32>
    %cst_56 = arith.constant 0.000000e+00 : f32
    %115 = vector.shape_cast %58 : vector<1x512xi1> to vector<1x512xi1>
    %116 = vector.broadcast %115 : vector<1x512xi1> to vector<4x512xi1>
    %117 = vector.broadcast %cst_56 : f32 to vector<4x512xf32>
    %118 = arith.select %116, %113, %117 : vector<4x512xi1>, vector<4x512xf32>
    %cst_57 = arith.constant 0.000000e+00 : f32
    %119 = vector.shape_cast %58 : vector<1x512xi1> to vector<1x512xi1>
    %120 = vector.broadcast %119 : vector<1x512xi1> to vector<4x512xi1>
    %121 = vector.broadcast %cst_57 : f32 to vector<4x512xf32>
    %122 = arith.select %120, %114, %121 : vector<4x512xi1>, vector<4x512xf32>
    %123 = arith.truncf %118 : vector<4x512xf32> to vector<4x512xbf16>
    %124 = arith.truncf %122 : vector<4x512xf32> to vector<4x512xbf16>
    %c12 = arith.constant 12 : index
    %c0_58 = arith.constant 0 : index
    %125 = vector.load %arg8[%c12, %c0_58] : memref<72x512xbf16, #tpu.memory_space<vmem>>, vector<4x512xbf16>
    tpu.vector_store %arg8[%c12, %c0_58], %123 {strides = array<i32>} : memref<72x512xbf16, #tpu.memory_space<vmem>>, vector<4x512xbf16>,
    %c48 = arith.constant 48 : index
    %c0_59 = arith.constant 0 : index
    %126 = vector.load %arg8[%c48, %c0_59] : memref<72x512xbf16, #tpu.memory_space<vmem>>, vector<4x512xbf16>
    tpu.vector_store %arg8[%c48, %c0_59], %124 {strides = array<i32>} : memref<72x512xbf16, #tpu.memory_space<vmem>>, vector<4x512xbf16>,
    %c0_60 = arith.constant 0 : index
    %c0_61 = arith.constant 0 : index
    %127 = vector.load %arg7[%c0_60, %c0_61] : memref<8x512xf32, #tpu.memory_space<vmem>>, vector<4x512xf32>
    %c4_62 = arith.constant 4 : index
    %c0_63 = arith.constant 0 : index
    %128 = vector.load %arg7[%c4_62, %c0_63] : memref<8x512xf32, #tpu.memory_space<vmem>>, vector<4x512xf32>
    %129 = arith.truncf %127 : vector<4x512xf32> to vector<4x512xbf16>
    %130 = arith.truncf %128 : vector<4x512xf32> to vector<4x512xbf16>
    %c16 = arith.constant 16 : index
    %c0_64 = arith.constant 0 : index
    %131 = vector.load %arg8[%c16, %c0_64] : memref<72x512xbf16, #tpu.memory_space<vmem>>, vector<4x512xbf16>
    tpu.vector_store %arg8[%c16, %c0_64], %129 {strides = array<i32>} : memref<72x512xbf16, #tpu.memory_space<vmem>>, vector<4x512xbf16>,
    %c52 = arith.constant 52 : index
    %c0_65 = arith.constant 0 : index
    %132 = vector.load %arg8[%c52, %c0_65] : memref<72x512xbf16, #tpu.memory_space<vmem>>, vector<4x512xbf16>
    tpu.vector_store %arg8[%c52, %c0_65], %130 {strides = array<i32>} : memref<72x512xbf16, #tpu.memory_space<vmem>>, vector<4x512xbf16>,
    %c0_66 = arith.constant 0 : index
    %c0_67 = arith.constant 0 : index
    %133 = vector.load %arg7[%c0_66, %c0_67] : memref<8x512xf32, #tpu.memory_space<vmem>>, vector<4x512xf32>
    %c4_68 = arith.constant 4 : index
    %c0_69 = arith.constant 0 : index
    %134 = vector.load %arg7[%c4_68, %c0_69] : memref<8x512xf32, #tpu.memory_space<vmem>>, vector<4x512xf32>
    %c511_i32 = arith.constant 511 : i32
    %135 = tpu.dynamic_rotate %133 by %c511_i32 dim 1 : vector<4x512xf32>, i32 -> vector<4x512xf32>
    %c511_i32_70 = arith.constant 511 : i32
    %136 = tpu.dynamic_rotate %134 by %c511_i32_70 dim 1 : vector<4x512xf32>, i32 -> vector<4x512xf32>
    %cst_71 = arith.constant 0.000000e+00 : f32
    %137 = vector.shape_cast %60 : vector<1x512xi1> to vector<1x512xi1>
    %138 = vector.broadcast %137 : vector<1x512xi1> to vector<4x512xi1>
    %139 = vector.broadcast %cst_71 : f32 to vector<4x512xf32>
    %140 = arith.select %138, %135, %139 : vector<4x512xi1>, vector<4x512xf32>
    %cst_72 = arith.constant 0.000000e+00 : f32
    %141 = vector.shape_cast %60 : vector<1x512xi1> to vector<1x512xi1>
    %142 = vector.broadcast %141 : vector<1x512xi1> to vector<4x512xi1>
    %143 = vector.broadcast %cst_72 : f32 to vector<4x512xf32>
    %144 = arith.select %142, %136, %143 : vector<4x512xi1>, vector<4x512xf32>
    %145 = arith.truncf %140 : vector<4x512xf32> to vector<4x512xbf16>
    %146 = arith.truncf %144 : vector<4x512xf32> to vector<4x512xbf16>
    %c20 = arith.constant 20 : index
    %c0_73 = arith.constant 0 : index
    %147 = vector.load %arg8[%c20, %c0_73] : memref<72x512xbf16, #tpu.memory_space<vmem>>, vector<4x512xbf16>
    tpu.vector_store %arg8[%c20, %c0_73], %145 {strides = array<i32>} : memref<72x512xbf16, #tpu.memory_space<vmem>>, vector<4x512xbf16>,
    %c56 = arith.constant 56 : index
    %c0_74 = arith.constant 0 : index
    %148 = vector.load %arg8[%c56, %c0_74] : memref<72x512xbf16, #tpu.memory_space<vmem>>, vector<4x512xbf16>
    tpu.vector_store %arg8[%c56, %c0_74], %146 {strides = array<i32>} : memref<72x512xbf16, #tpu.memory_space<vmem>>, vector<4x512xbf16>,
    %c0_75 = arith.constant 0 : index
    %c0_76 = arith.constant 0 : index
    %149 = vector.load %arg7[%c0_75, %c0_76] : memref<8x512xf32, #tpu.memory_space<vmem>>, vector<4x512xf32>
    %c4_77 = arith.constant 4 : index
    %c0_78 = arith.constant 0 : index
    %150 = vector.load %arg7[%c4_77, %c0_78] : memref<8x512xf32, #tpu.memory_space<vmem>>, vector<4x512xf32>
    %c497_i32 = arith.constant 497 : i32
    %151 = tpu.dynamic_rotate %149 by %c497_i32 dim 1 : vector<4x512xf32>, i32 -> vector<4x512xf32>
    %c497_i32_79 = arith.constant 497 : i32
    %152 = tpu.dynamic_rotate %150 by %c497_i32_79 dim 1 : vector<4x512xf32>, i32 -> vector<4x512xf32>
    %153 = arith.andi %56, %58 : vector<1x512xi1>
    %cst_80 = arith.constant 0.000000e+00 : f32
    %154 = vector.shape_cast %153 : vector<1x512xi1> to vector<1x512xi1>
    %155 = vector.broadcast %154 : vector<1x512xi1> to vector<4x512xi1>
    %156 = vector.broadcast %cst_80 : f32 to vector<4x512xf32>
    %157 = arith.select %155, %151, %156 : vector<4x512xi1>, vector<4x512xf32>
    %cst_81 = arith.constant 0.000000e+00 : f32
    %158 = vector.shape_cast %153 : vector<1x512xi1> to vector<1x512xi1>
    %159 = vector.broadcast %158 : vector<1x512xi1> to vector<4x512xi1>
    %160 = vector.broadcast %cst_81 : f32 to vector<4x512xf32>
    %161 = arith.select %159, %152, %160 : vector<4x512xi1>, vector<4x512xf32>
    %162 = arith.truncf %157 : vector<4x512xf32> to vector<4x512xbf16>
    %163 = arith.truncf %161 : vector<4x512xf32> to vector<4x512xbf16>
    %c24 = arith.constant 24 : index
    %c0_82 = arith.constant 0 : index
    %164 = vector.load %arg8[%c24, %c0_82] : memref<72x512xbf16, #tpu.memory_space<vmem>>, vector<4x512xbf16>
    tpu.vector_store %arg8[%c24, %c0_82], %162 {strides = array<i32>} : memref<72x512xbf16, #tpu.memory_space<vmem>>, vector<4x512xbf16>,
    %c60 = arith.constant 60 : index
    %c0_83 = arith.constant 0 : index
    %165 = vector.load %arg8[%c60, %c0_83] : memref<72x512xbf16, #tpu.memory_space<vmem>>, vector<4x512xbf16>
    tpu.vector_store %arg8[%c60, %c0_83], %163 {strides = array<i32>} : memref<72x512xbf16, #tpu.memory_space<vmem>>, vector<4x512xbf16>,
    %c0_84 = arith.constant 0 : index
    %c0_85 = arith.constant 0 : index
    %166 = vector.load %arg7[%c0_84, %c0_85] : memref<8x512xf32, #tpu.memory_space<vmem>>, vector<4x512xf32>
    %c4_86 = arith.constant 4 : index
    %c0_87 = arith.constant 0 : index
    %167 = vector.load %arg7[%c4_86, %c0_87] : memref<8x512xf32, #tpu.memory_space<vmem>>, vector<4x512xf32>
    %c496_i32 = arith.constant 496 : i32
    %168 = tpu.dynamic_rotate %166 by %c496_i32 dim 1 : vector<4x512xf32>, i32 -> vector<4x512xf32>
    %c496_i32_88 = arith.constant 496 : i32
    %169 = tpu.dynamic_rotate %167 by %c496_i32_88 dim 1 : vector<4x512xf32>, i32 -> vector<4x512xf32>
    %cst_89 = arith.constant 0.000000e+00 : f32
    %170 = vector.shape_cast %56 : vector<1x512xi1> to vector<1x512xi1>
    %171 = vector.broadcast %170 : vector<1x512xi1> to vector<4x512xi1>
    %172 = vector.broadcast %cst_89 : f32 to vector<4x512xf32>
    %173 = arith.select %171, %168, %172 : vector<4x512xi1>, vector<4x512xf32>
    %cst_90 = arith.constant 0.000000e+00 : f32
    %174 = vector.shape_cast %56 : vector<1x512xi1> to vector<1x512xi1>
    %175 = vector.broadcast %174 : vector<1x512xi1> to vector<4x512xi1>
    %176 = vector.broadcast %cst_90 : f32 to vector<4x512xf32>
    %177 = arith.select %175, %169, %176 : vector<4x512xi1>, vector<4x512xf32>
    %178 = arith.truncf %173 : vector<4x512xf32> to vector<4x512xbf16>
    %179 = arith.truncf %177 : vector<4x512xf32> to vector<4x512xbf16>
    %c28 = arith.constant 28 : index
    %c0_91 = arith.constant 0 : index
    %180 = vector.load %arg8[%c28, %c0_91] : memref<72x512xbf16, #tpu.memory_space<vmem>>, vector<4x512xbf16>
    tpu.vector_store %arg8[%c28, %c0_91], %178 {strides = array<i32>} : memref<72x512xbf16, #tpu.memory_space<vmem>>, vector<4x512xbf16>,
    %c64 = arith.constant 64 : index
    %c0_92 = arith.constant 0 : index
    %181 = vector.load %arg8[%c64, %c0_92] : memref<72x512xbf16, #tpu.memory_space<vmem>>, vector<4x512xbf16>
    tpu.vector_store %arg8[%c64, %c0_92], %179 {strides = array<i32>} : memref<72x512xbf16, #tpu.memory_space<vmem>>, vector<4x512xbf16>,
    %c0_93 = arith.constant 0 : index
    %c0_94 = arith.constant 0 : index
    %182 = vector.load %arg7[%c0_93, %c0_94] : memref<8x512xf32, #tpu.memory_space<vmem>>, vector<4x512xf32>
    %c4_95 = arith.constant 4 : index
    %c0_96 = arith.constant 0 : index
    %183 = vector.load %arg7[%c4_95, %c0_96] : memref<8x512xf32, #tpu.memory_space<vmem>>, vector<4x512xf32>
    %c495_i32 = arith.constant 495 : i32
    %184 = tpu.dynamic_rotate %182 by %c495_i32 dim 1 : vector<4x512xf32>, i32 -> vector<4x512xf32>
    %c495_i32_97 = arith.constant 495 : i32
    %185 = tpu.dynamic_rotate %183 by %c495_i32_97 dim 1 : vector<4x512xf32>, i32 -> vector<4x512xf32>
    %186 = arith.andi %56, %60 : vector<1x512xi1>
    %cst_98 = arith.constant 0.000000e+00 : f32
    %187 = vector.shape_cast %186 : vector<1x512xi1> to vector<1x512xi1>
    %188 = vector.broadcast %187 : vector<1x512xi1> to vector<4x512xi1>
    %189 = vector.broadcast %cst_98 : f32 to vector<4x512xf32>
    %190 = arith.select %188, %184, %189 : vector<4x512xi1>, vector<4x512xf32>
    %cst_99 = arith.constant 0.000000e+00 : f32
    %191 = vector.shape_cast %186 : vector<1x512xi1> to vector<1x512xi1>
    %192 = vector.broadcast %191 : vector<1x512xi1> to vector<4x512xi1>
    %193 = vector.broadcast %cst_99 : f32 to vector<4x512xf32>
    %194 = arith.select %192, %185, %193 : vector<4x512xi1>, vector<4x512xf32>
    %195 = arith.truncf %190 : vector<4x512xf32> to vector<4x512xbf16>
    %196 = arith.truncf %194 : vector<4x512xf32> to vector<4x512xbf16>
    %c32 = arith.constant 32 : index
    %c0_100 = arith.constant 0 : index
    %197 = vector.load %arg8[%c32, %c0_100] : memref<72x512xbf16, #tpu.memory_space<vmem>>, vector<4x512xbf16>
    tpu.vector_store %arg8[%c32, %c0_100], %195 {strides = array<i32>} : memref<72x512xbf16, #tpu.memory_space<vmem>>, vector<4x512xbf16>,
    %c68 = arith.constant 68 : index
    %c0_101 = arith.constant 0 : index
    %198 = vector.load %arg8[%c68, %c0_101] : memref<72x512xbf16, #tpu.memory_space<vmem>>, vector<4x512xbf16>
    tpu.vector_store %arg8[%c68, %c0_101], %196 {strides = array<i32>} : memref<72x512xbf16, #tpu.memory_space<vmem>>, vector<4x512xbf16>,
    %c0_102 = arith.constant 0 : index
    %c0_103 = arith.constant 0 : index
    %199 = vector.load %arg4[%c0_102, %c0_103] : memref<8x36xbf16, #tpu.memory_space<vmem>>, vector<4x36xbf16>
    %c0_104 = arith.constant 0 : index
    %c0_105 = arith.constant 0 : index
    %200 = vector.load %arg8[%c0_104, %c0_105] : memref<72x512xbf16, #tpu.memory_space<vmem>>, vector<36x512xbf16>
    %cst_106 = arith.constant dense<0.000000e+00> : vector<4x512xf32>
    %201 = tpu.matmul %199, %200, %cst_106 {dimension_numbers = #tpu.dot_dimension_numbers<[1], [0], [0], [1], [0, 0, 1, 1], [], []>} : vector<4x36xbf16>, vector<36x512xbf16>, vector<4x512xf32> -> vector<4x512xf32>
    %c4_107 = arith.constant 4 : index
    %c0_108 = arith.constant 0 : index
    %202 = vector.load %arg4[%c4_107, %c0_108] : memref<8x36xbf16, #tpu.memory_space<vmem>>, vector<4x36xbf16>
    %c36_109 = arith.constant 36 : index
    %c0_110 = arith.constant 0 : index
    %203 = vector.load %arg8[%c36_109, %c0_110] : memref<72x512xbf16, #tpu.memory_space<vmem>>, vector<36x512xbf16>
    %cst_111 = arith.constant dense<0.000000e+00> : vector<4x512xf32>
    %204 = tpu.matmul %202, %203, %cst_111 {dimension_numbers = #tpu.dot_dimension_numbers<[1], [0], [0], [1], [0, 0, 1, 1], [], []>} : vector<4x36xbf16>, vector<36x512xbf16>, vector<4x512xf32> -> vector<4x512xf32>
    %c0_112 = arith.constant 0 : index
    %c0_113 = arith.constant 0 : index
    %205 = vector.load %arg5[%c0_112, %c0_113] : memref<8x1xf32, #tpu.memory_space<vmem>>, vector<4x1xf32>
    %206 = vector.broadcast %205 : vector<4x1xf32> to vector<4x512xf32>
    %207 = arith.addf %201, %206 : vector<4x512xf32>
    %cst_114 = arith.constant 0.000000e+00 : f32
    %208 = vector.broadcast %cst_114 : f32 to vector<4x512xf32>
    %209 = arith.subf %208, %207 : vector<4x512xf32>
    %210 = math.exp %209 : vector<4x512xf32>
    %cst_115 = arith.constant 1.000000e+00 : f32
    %211 = vector.broadcast %cst_115 : f32 to vector<4x512xf32>
    %212 = arith.addf %211, %210 : vector<4x512xf32>
    %213 = tpu.reciprocal %212 {approx = true} : vector<4x512xf32> -> vector<4x512xf32>
    %214 = arith.mulf %207, %213 : vector<4x512xf32>
    %c0_116 = arith.constant 0 : index
    %c0_117 = arith.constant 0 : index
    %215 = vector.load %arg6[%c0_116, %c0_117] : memref<8x512xf32, #tpu.memory_space<vmem>>, vector<4x512xf32>
    tpu.vector_store %arg6[%c0_116, %c0_117], %214 {strides = array<i32>} : memref<8x512xf32, #tpu.memory_space<vmem>>, vector<4x512xf32>,
    %c4_118 = arith.constant 4 : index
    %c0_119 = arith.constant 0 : index
    %216 = vector.load %arg5[%c4_118, %c0_119] : memref<8x1xf32, #tpu.memory_space<vmem>>, vector<4x1xf32>
    %217 = vector.broadcast %216 : vector<4x1xf32> to vector<4x512xf32>
    %218 = arith.addf %204, %217 : vector<4x512xf32>
    %cst_120 = arith.constant 0.000000e+00 : f32
    %219 = vector.broadcast %cst_120 : f32 to vector<4x512xf32>
    %220 = arith.subf %219, %218 : vector<4x512xf32>
    %221 = math.exp %220 : vector<4x512xf32>
    %cst_121 = arith.constant 1.000000e+00 : f32
    %222 = vector.broadcast %cst_121 : f32 to vector<4x512xf32>
    %223 = arith.addf %222, %221 : vector<4x512xf32>
    %224 = tpu.reciprocal %223 {approx = true} : vector<4x512xf32> -> vector<4x512xf32>
    %225 = arith.mulf %218, %224 : vector<4x512xf32>
    %c4_122 = arith.constant 4 : index
    %c0_123 = arith.constant 0 : index
    %226 = vector.load %arg6[%c4_122, %c0_123] : memref<8x512xf32, #tpu.memory_space<vmem>>, vector<4x512xf32>
    tpu.vector_store %arg6[%c4_122, %c0_123], %225 {strides = array<i32>} : memref<8x512xf32, #tpu.memory_space<vmem>>, vector<4x512xf32>,
    return
  }
  func.func @transform_0(%arg0: i32) -> (i32, i32) {
    %c0_i32 = arith.constant 0 : i32
    %c0_i32_0 = arith.constant 0 : i32
    return %c0_i32, %arg0 : i32, i32
  }
  func.func @transform_1(%arg0: i32) -> (i32, i32) {
    %c0_i32 = arith.constant 0 : i32
    %c0_i32_0 = arith.constant 0 : i32
    %c0_i32_1 = arith.constant 0 : i32
    return %c0_i32, %c0_i32_0 : i32, i32
  }
  func.func @transform_2(%arg0: i32) -> (i32, i32) {
    %c0_i32 = arith.constant 0 : i32
    %c0_i32_0 = arith.constant 0 : i32
    %c0_i32_1 = arith.constant 0 : i32
    return %c0_i32, %c0_i32_0 : i32, i32
  }
  func.func @transform_3(%arg0: i32) -> (i32, i32) {
    %c0_i32 = arith.constant 0 : i32
    %c0_i32_0 = arith.constant 0 : i32
    %c0_i32_1 = arith.constant 0 : i32
    return %c0_i32, %c0_i32_0 : i32, i32
  }
  func.func @transform_4(%arg0: i32) -> (i32, i32) {
    %c0_i32 = arith.constant 0 : i32
    %c0_i32_0 = arith.constant 0 : i32
    %c0_i32_1 = arith.constant 0 : i32
    return %c0_i32, %c0_i32_0 : i32, i32
  }
  func.func @transform_5(%arg0: i32) -> (i32, i32) {
    %c0_i32 = arith.constant 0 : i32
    %c0_i32_0 = arith.constant 0 : i32
    return %c0_i32, %arg0 : i32, i32
  }
}

</mosaic_0001>

<llo_original>
// kernel: dprc_pallas.1
$region0: #{dprc_pallas.1}
  #allocation0 [shape = 'u32[]', space=smem, size = 0x4, offset = 0x4, fixed_abs, tag = 'smem constant byte address 0x4 - core index']
  #allocation1 [shape = 'u32[144,128]{1,0:T(1,128)}', space=vmem, size = 0x12000, scoped, tag = 'internal scratch']
  #allocation2 [shape = 'f32[8,512]{1,0:T(8,128)}', space=vmem, size = 0x4000, scoped, tag = 'scratch operand']
  #allocation3 [shape = 'bf16[72,512]{1,0:T(8,128)(2,1)}', space=vmem, size = 0x12000, scoped, tag = 'scratch operand']
  %s0 = inlined_call_operand.vmem [shape: f32[4,512], index: 0, kind: input, shape index: {}]
  %s1 = inlined_call_operand.vmem [shape: bf16[8,4], index: 1, kind: input, shape index: {}]
  %s2 = inlined_call_operand.vmem [shape: f32[8,1], index: 2, kind: input, shape index: {}]
  %s3 = inlined_call_operand.vmem [shape: bf16[8,36], index: 3, kind: input, shape index: {}]
  %s4 = inlined_call_operand.vmem [shape: f32[8,1], index: 4, kind: input, shape index: {}]
  %s5 = inlined_call_operand.vmem [shape: f32[8,512], index: 5, kind: output, shape index: {}]
  %s6 = sld [smem:[#allocation0]]
  $region30: #{dprc_pallas.1} parent=0
    _
  %s8 = ssub.s32 1, %s6
  %s9 = scalar_select 0, %s8, %s6
  // Predicated region
  $region2: #{dprc_pallas.1} parent=0 // pred_check
    _
  $region3: #{dprc_pallas.1} parent=0 // pred_check_branch
    %11 = sbr.rel (0) target = $region5
  $region4: #{dprc_pallas.1} parent=0 // pred_region
    _
  $region5: #{dprc_pallas.1} parent=0 // pred_fallthru
    _
  // Predicated region
  $region6: #{dprc_pallas.1} parent=0 // pred_check
    _
  $region7: #{dprc_pallas.1} parent=0 // pred_check_branch
    %13 = sbr.rel (0) target = $region9
  $region8: #{dprc_pallas.1} parent=0 // pred_region
    _
  $region9: #{dprc_pallas.1} parent=0 // pred_fallthru
    _
  // Predicated region
  $region10: #{dprc_pallas.1} parent=0 // pred_check
    _
  $region11: #{dprc_pallas.1} parent=0 // pred_check_branch
    %15 = sbr.rel (0) target = $region13
  $region12: #{dprc_pallas.1} parent=0 // pred_region
    _
  $region13: #{dprc_pallas.1} parent=0 // pred_fallthru
    _
  // Predicated region
  $region14: #{dprc_pallas.1} parent=0 // pred_check
    _
  $region15: #{dprc_pallas.1} parent=0 // pred_check_branch
    %17 = sbr.rel (0) target = $region17
  $region16: #{dprc_pallas.1} parent=0 // pred_region
    _
  $region17: #{dprc_pallas.1} parent=0 // pred_fallthru
    _
  // Predicated region
  $region18: #{dprc_pallas.1} parent=0 // pred_check
    _
  $region19: #{dprc_pallas.1} parent=0 // pred_check_branch
    %19 = sbr.rel (0) target = $region21
  $region20: #{dprc_pallas.1} parent=0 // pred_region
    _
  $region21: #{dprc_pallas.1} parent=0 // pred_fallthru
    _
  %v21 = vld [vmem:[%s0] sm:$0xff]
  %v22 = vld [vmem:[%s0 + $0x8] sm:$0xff]
  %v25 = vcombine.high %v21, %v21
  %v26 = vcombine.high %v22, %v22
  %v29 = vpack.c.bf16 %v21, %v21
  %v30 = vpack.c.bf16 %v25, %v25
  %v31 = vpack.c.bf16 %v22, %v22
  %v32 = vpack.c.bf16 %v26, %v26
  %v33 = vld [vmem:[%s1] sm:$0xf]
  %v34 = vld [vmem:[%s2] sm:$0xff]
  %36 = vset.pattern.permute.xlu0 0
  %37 = vperm.xlu0 %36, %v34
  %v38 = vpop.permute.xlu0 %37
  %vm40 = vcmask 31744
  %v42 = vsel %vm40, %v33, 0
  %vm44 = vcmask 1041408
  %v46 = vsel %vm44, %v29, 0
  %v49 = vsel %vm44, %v30, 0
  %v52 = vsel %vm44, %v31, 0
  %v55 = vsel %vm44, %v32, 0
  %57 = vmatprep.subr.bf16.mxu0 %v49
  %58 = vmatpush1.bf16.msra.mxu0 %v46
  %59 = vmatprep.subr.bf16.mxu0 0
  %60 = vmatpush1.bf16.msra.mxu0 0
  %61 = vmatprep.subr.bf16.mxu0 0
  %62 = vmatpush1.bf16.msra.mxu0 0
  %63 = vmatprep.subr.bf16.mxu0 0
  %64 = vmatpush1.bf16.msra.mxu0 0
  %65 = vmatprep.subr.bf16.mxu0 0
  %66 = vmatpush1.bf16.msra.mxu0 0
  %67 = vmatprep.subr.bf16.mxu0 0
  %68 = vmatpush1.bf16.msra.mxu0 0
  %69 = vmatprep.subr.bf16.mxu0 0
  %70 = vmatpush1.bf16.msra.mxu0 0
  %71 = vmatprep.subr.bf16.mxu0 0
  %72 = vmatpush1.bf16.msra.mxu0 0
  %73 = vmatprep.subr.bf16.mxu0 0
  %74 = vmatpush1.bf16.msra.mxu0 0
  %75 = vmatprep.subr.bf16.mxu0 0
  %76 = vmatpush1.bf16.msra.mxu0 0
  %77 = vmatprep.subr.bf16.mxu0 0
  %78 = vmatpush1.bf16.msra.mxu0 0
  %79 = vmatprep.subr.bf16.mxu0 0
  %80 = vmatpush1.bf16.msra.mxu0 0
  %81 = vmatprep.subr.bf16.mxu0 0
  %82 = vmatpush1.bf16.msra.mxu0 0
  %83 = vmatprep.subr.bf16.mxu0 0
  %84 = vmatpush1.bf16.msra.mxu0 0
  %85 = vmatprep.subr.bf16.mxu0 0
  %86 = vmatpush1.bf16.msra.mxu0 0
  %87 = vmatprep.subr.bf16.mxu0 0
  %88 = vmatpush1.bf16.msra.mxu0 0
  %89 = vmatprep.mubr.bf16.mxu0 0
  %90 = vmatmul.mubr.bf16.gmra.mrb[0].mxu0 %v42
  %v91 = vpop.f32.mrb[0].mxu0
  %v92 = vadd.f32 %v38, %v91
  %v93 = vpop.f32.mrb[0].mxu0
  %v94 = vadd.f32 %v38, %v93
  %v95 = vpop.f32.mrb[0].mxu0
  %v96 = vpop.f32.mrb[0].mxu0
  %97 = vdwg.mxu0
  %98 = vmatprep.subr.bf16.mxu0 %v55
  %99 = vmatpush1.bf16.msra.mxu0 %v52
  %100 = vmatprep.subr.bf16.mxu0 0
  %101 = vmatpush1.bf16.msra.mxu0 0
  %102 = vmatprep.subr.bf16.mxu0 0
  %103 = vmatpush1.bf16.msra.mxu0 0
  %104 = vmatprep.subr.bf16.mxu0 0
  %105 = vmatpush1.bf16.msra.mxu0 0
  %106 = vmatprep.subr.bf16.mxu0 0
  %107 = vmatpush1.bf16.msra.mxu0 0
  %108 = vmatprep.subr.bf16.mxu0 0
  %109 = vmatpush1.bf16.msra.mxu0 0
  %110 = vmatprep.subr.bf16.mxu0 0
  %111 = vmatpush1.bf16.msra.mxu0 0
  %112 = vmatprep.subr.bf16.mxu0 0
  %113 = vmatpush1.bf16.msra.mxu0 0
  %114 = vmatprep.subr.bf16.mxu0 0
  %115 = vmatpush1.bf16.msra.mxu0 0
  %116 = vmatprep.subr.bf16.mxu0 0
  %117 = vmatpush1.bf16.msra.mxu0 0
  %118 = vmatprep.subr.bf16.mxu0 0
  %119 = vmatpush1.bf16.msra.mxu0 0
  %120 = vmatprep.subr.bf16.mxu0 0
  %121 = vmatpush1.bf16.msra.mxu0 0
  %122 = vmatprep.subr.bf16.mxu0 0
  %123 = vmatpush1.bf16.msra.mxu0 0
  %124 = vmatprep.subr.bf16.mxu0 0
  %125 = vmatpush1.bf16.msra.mxu0 0
  %126 = vmatprep.subr.bf16.mxu0 0
  %127 = vmatpush1.bf16.msra.mxu0 0
  %128 = vmatprep.subr.bf16.mxu0 0
  %129 = vmatpush1.bf16.msra.mxu0 0
  %130 = vmatprep.mubr.bf16.mxu0 0
  %131 = vmatmul.mubr.bf16.gmra.mrb[0].mxu0 %v42
  %v132 = vpop.f32.mrb[0].mxu0
  %v133 = vadd.f32 %v38, %v132
  %v134 = vpop.f32.mrb[0].mxu0
  %v135 = vadd.f32 %v38, %v134
  %v136 = vpop.f32.mrb[0].mxu0
  %v137 = vpop.f32.mrb[0].mxu0
  %138 = vdwg.mxu0
  %v139 = vsub.f32 0.0, %v92
  %v140 = vsub.f32 0.0, %v94
  %v141 = vsub.f32 0.0, %v133
  %v142 = vsub.f32 0.0, %v135
  %v143 = vmul.f32 %v139, 1.442695
  %v144 = vpow.pop %v143
  %v145 = vmul.f32 %v140, 1.442695
  %v146 = vpow.pop %v145
  %v147 = vmul.f32 %v141, 1.442695
  %v148 = vpow.pop %v147
  %v149 = vmul.f32 %v142, 1.442695
  %v150 = vpow.pop %v149
  %v151 = vadd.f32 %v144, 1.0
  %v152 = vadd.f32 %v146, 1.0
  %v153 = vadd.f32 %v148, 1.0
  %v154 = vadd.f32 %v150, 1.0
  %v155 = vrcp.pop %v151
  %v156 = vrcp.pop %v152
  %v157 = vrcp.pop %v153
  %v158 = vrcp.pop %v154
  %v159 = vmul.f32 %v92, %v155
  %v160 = vmul.f32 %v94, %v156
  %v161 = vmul.f32 %v133, %v157
  %v162 = vmul.f32 %v135, %v158
  %v163 = vadd.f32 %v159, %v21
  %v164 = vadd.f32 %v160, %v25
  %v165 = vadd.f32 %v161, %v22
  %v166 = vadd.f32 %v162, %v26
  %167 = vst [vmem:[#allocation2] sm:$0xf] %v163
  %168 = vst [vmem:[#allocation2 + $0x8] sm:$0xf] %v164
  %169 = vst [vmem:[#allocation2 + $0x10] sm:$0xf] %v165
  %170 = vst [vmem:[#allocation2 + $0x18] sm:$0xf] %v166
  %v171 = vcombine.low %v21, %v21
  %v172 = vcombine.low %v22, %v22
  %v175 = vadd.f32 %v159, %v171
  %v176 = vadd.f32 %v160, %v21
  %v177 = vadd.f32 %v161, %v172
  %v178 = vadd.f32 %v162, %v22
  %179 = vst [vmem:[#allocation2] sm:$0xf0] %v175
  %180 = vst [vmem:[#allocation2 + $0x8] sm:$0xf0] %v176
  %181 = vst [vmem:[#allocation2 + $0x10] sm:$0xf0] %v177
  %182 = vst [vmem:[#allocation2 + $0x18] sm:$0xf0] %v178
  %v183 = vlaneseq
  %v184 = vand.u32 %v183, 127
  %v185 = vadd.s32 %v184, 128
  %v186 = vadd.s32 %v184, 256
  %v187 = vadd.s32 %v184, 384
  %vm188 = vcmp.lt.s32.totalorder %v184, 0
  %v189 = vsub.s32 0, %v184
  %v190 = vsel %vm188, %v189, %v184
  %v191 = vshrl.u32 %v190, 8
  %v192 = vand.u32 %v190, 255
  %v193 = vsub.s32 0, %v192
  %v194 = vsel %vm188, %v193, %v192
  %vm195 = vcmp.lt.s32.totalorder %v185, 0
  %v196 = vsub.s32 0, %v185
  %v197 = vsel %vm195, %v196, %v185
  %v198 = vshrl.u32 %v197, 8
  %v199 = vand.u32 %v197, 255
  %v200 = vsub.s32 0, %v199
  %v201 = vsel %vm195, %v200, %v199
  %vm202 = vcmp.lt.s32.totalorder %v186, 0
  %v203 = vsub.s32 0, %v186
  %v204 = vsel %vm202, %v203, %v186
  %v205 = vshrl.u32 %v204, 8
  %v206 = vand.u32 %v204, 255
  %v207 = vsub.s32 0, %v206
  %v208 = vsel %vm202, %v207, %v206
  %vm209 = vcmp.lt.s32.totalorder %v187, 0
  %v210 = vsub.s32 0, %v187
  %v211 = vsel %vm209, %v210, %v187
  %v212 = vshrl.u32 %v211, 8
  %v213 = vand.u32 %v211, 255
  %v214 = vsub.s32 0, %v213
  %v215 = vsel %vm209, %v214, %v213
  %vm216 = vcmp.ne.s32.totalorder %v194, 0
  %vm217 = vcmp.ne.s32.totalorder %v201, 0
  %vm218 = vcmp.ne.s32.totalorder %v208, 0
  %vm219 = vcmp.ne.s32.totalorder %v215, 0
  %vm220 = vcmp.lt.s32.totalorder %v194, 0
  %vm221 = vcmp.lt.s32.totalorder %v201, 0
  %vm222 = vcmp.lt.s32.totalorder %v208, 0
  %vm223 = vcmp.lt.s32.totalorder %v215, 0
  %vm224 = vmand %vm220, %vm216
  %vm225 = vmand %vm221, %vm217
  %vm226 = vmand %vm222, %vm218
  %vm227 = vmand %vm223, %vm219
  %v228 = vadd.s32 %v194, 256
  %v229 = vadd.s32 %v201, 256
  %v230 = vadd.s32 %v208, 256
  %v231 = vadd.s32 %v215, 256
  %v232 = vsel %vm224, %v228, %v194
  %v233 = vsel %vm225, %v229, %v201
  %v234 = vsel %vm226, %v230, %v208
  %v235 = vsel %vm227, %v231, %v215
  %vm236 = vcmp.lt.s32.totalorder %v232, 0
  %v237 = vsub.s32 0, %v232
  %v238 = vsel %vm236, %v237, %v232
  %v239 = vshrl.u32 %v238, 4
  %v240 = vand.u32 %v238, 15
  %v241 = vsub.s32 0, %v240
  %v242 = vsel %vm236, %v241, %v240
  %vm243 = vcmp.lt.s32.totalorder %v233, 0
  %v244 = vsub.s32 0, %v233
  %v245 = vsel %vm243, %v244, %v233
  %v246 = vshrl.u32 %v245, 4
  %v247 = vand.u32 %v245, 15
  %v248 = vsub.s32 0, %v247
  %v249 = vsel %vm243, %v248, %v247
  %vm250 = vcmp.lt.s32.totalorder %v234, 0
  %v251 = vsub.s32 0, %v234
  %v252 = vsel %vm250, %v251, %v234
  %v253 = vshrl.u32 %v252, 4
  %v254 = vand.u32 %v252, 15
  %v255 = vsub.s32 0, %v254
  %v256 = vsel %vm250, %v255, %v254
  %vm257 = vcmp.lt.s32.totalorder %v235, 0
  %v258 = vsub.s32 0, %v235
  %v259 = vsel %vm257, %v258, %v235
  %v260 = vshrl.u32 %v259, 4
  %v261 = vand.u32 %v259, 15
  %v262 = vsub.s32 0, %v261
  %v263 = vsel %vm257, %v262, %v261
  %vm264 = vcmp.ne.s32.totalorder %v242, 0
  %vm265 = vcmp.ne.s32.totalorder %v249, 0
  %vm266 = vcmp.ne.s32.totalorder %v256, 0
  %vm267 = vcmp.ne.s32.totalorder %v263, 0
  %vm268 = vcmp.lt.s32.totalorder %v242, 0
  %vm269 = vcmp.lt.s32.totalorder %v249, 0
  %vm270 = vcmp.lt.s32.totalorder %v256, 0
  %vm271 = vcmp.lt.s32.totalorder %v263, 0
  %vm272 = vmand %vm268, %vm264
  %vm273 = vmand %vm269, %vm265
  %vm274 = vmand %vm270, %vm266
  %vm275 = vmand %vm271, %vm267
  %v276 = vadd.s32 %v242, 16
  %v277 = vadd.s32 %v249, 16
  %v278 = vadd.s32 %v256, 16
  %v279 = vadd.s32 %v263, 16
  %v280 = vsel %vm272, %v276, %v242
  %v281 = vsel %vm273, %v277, %v249
  %v282 = vsel %vm274, %v278, %v256
  %v283 = vsel %vm275, %v279, %v263
  %vm284 = vcmp.ge.s32.totalorder %v232, 16
  %vm285 = vcmp.ge.s32.totalorder %v233, 16
  %vm286 = vcmp.ge.s32.totalorder %v234, 16
  %vm287 = vcmp.ge.s32.totalorder %v235, 16
  %vm288 = vcmp.lt.s32.totalorder %v232, 240
  %vm289 = vcmp.lt.s32.totalorder %v233, 240
  %vm290 = vcmp.lt.s32.totalorder %v234, 240
  %vm291 = vcmp.lt.s32.totalorder %v235, 240
  %vm292 = vcmp.ge.s32.totalorder %v280, 1
  %vm293 = vcmp.ge.s32.totalorder %v281, 1
  %vm294 = vcmp.ge.s32.totalorder %v282, 1
  %vm295 = vcmp.ge.s32.totalorder %v283, 1
  %vm296 = vcmp.le.s32.totalorder %v280, 14
  %vm297 = vcmp.le.s32.totalorder %v281, 14
  %vm298 = vcmp.le.s32.totalorder %v282, 14
  %vm299 = vcmp.le.s32.totalorder %v283, 14
  %v300 = vld [vmem:[#allocation2] sm:$0xf]
  %v301 = vld [vmem:[#allocation2 + $0x8] sm:$0xf]
  %v302 = vld [vmem:[#allocation2 + $0x10] sm:$0xf]
  %v303 = vld [vmem:[#allocation2 + $0x18] sm:$0xf]
  %v304 = vld [vmem:[#allocation2] sm:$0xf0]
  %v305 = vld [vmem:[#allocation2 + $0x8] sm:$0xf0]
  %v306 = vld [vmem:[#allocation2 + $0x10] sm:$0xf0]
  %v307 = vld [vmem:[#allocation2 + $0x18] sm:$0xf0]
  %308 = vrot.lane.b32.xlu0 %v300, 17
  %v309 = vpop.permute.xlu0 %308
  %310 = vrot.lane.b32.xlu0 %v301, 17
  %v311 = vpop.permute.xlu0 %310
  %312 = vrot.lane.b32.xlu0 %v302, 17
  %v313 = vpop.permute.xlu0 %312
  %314 = vrot.lane.b32.xlu0 %v303, 17
  %v315 = vpop.permute.xlu0 %314
  %vm316 = vcmp.lt.s32.totalorder %v184, 17
  %v317 = vsel %vm316, %v313, %v315
  %v318 = vsel %vm316, %v311, %v313
  %v319 = vsel %vm316, %v309, %v311
  %v320 = vsel %vm316, %v315, %v309
  %v325 = vrot.slane %v304, 4
  %v326 = vrot.slane %v305, 4
  %v327 = vrot.slane %v306, 4
  %v328 = vrot.slane %v307, 4
  %333 = vrot.lane.b32.xlu0 %v325, 17
  %v334 = vpop.permute.xlu0 %333
  %335 = vrot.lane.b32.xlu0 %v326, 17
  %v336 = vpop.permute.xlu0 %335
  %337 = vrot.lane.b32.xlu0 %v327, 17
  %v338 = vpop.permute.xlu0 %337
  %339 = vrot.lane.b32.xlu0 %v328, 17
  %v340 = vpop.permute.xlu0 %339
  %v341 = vsel %vm316, %v338, %v340
  %v342 = vsel %vm316, %v336, %v338
  %v343 = vsel %vm316, %v334, %v336
  %v344 = vsel %vm316, %v340, %v334
  %vm345 = vmand %vm284, %vm292
  %vm346 = vmand %vm285, %vm293
  %vm347 = vmand %vm286, %vm294
  %vm348 = vmand %vm287, %vm295
  %v349 = vsel %vm345, 1, 0
  %v350 = vsel %vm346, 1, 0
  %v351 = vsel %vm347, 1, 0
  %v352 = vsel %vm348, 1, 0
  %vm353 = vcmp.eq.s32.totalorder %v349, 1
  %vm354 = vcmp.eq.s32.totalorder %v350, 1
  %vm355 = vcmp.eq.s32.totalorder %v351, 1
  %vm356 = vcmp.eq.s32.totalorder %v352, 1
  %v357 = vsel %vm353, %v320, 0.0
  %v358 = vsel %vm354, %v319, 0.0
  %v359 = vsel %vm355, %v318, 0.0
  %v360 = vsel %vm356, %v317, 0.0
  %v361 = vsel %vm353, %v344, 0.0
  %v362 = vsel %vm354, %v343, 0.0
  %v363 = vsel %vm355, %v342, 0.0
  %v364 = vsel %vm356, %v341, 0.0
  %v365 = vpack.c.bf16 %v357, %v357
  %v366 = vpack.c.bf16 %v358, %v358
  %v367 = vpack.c.bf16 %v359, %v359
  %v368 = vpack.c.bf16 %v360, %v360
  %v369 = vpack.c.bf16 %v361, %v361
  %v370 = vpack.c.bf16 %v362, %v362
  %v371 = vpack.c.bf16 %v363, %v363
  %v372 = vpack.c.bf16 %v364, %v364
  %v377 = vunpack.c.l.b16 %v365
  %v378 = vunpack.c.l.b16 %v366
  %v379 = vunpack.c.l.b16 %v367
  %v380 = vunpack.c.l.b16 %v368
  %v381 = vpack.c.b16 %v378, %v377
  %v382 = vpack.c.b16 %v380, %v379
  %385 = vst [vmem:[#allocation3] sm:$0x33] %v381
  %386 = vst [vmem:[#allocation3 + $0x8] sm:$0x33] %v382
  %v391 = vunpack.c.l.b16 %v369
  %v392 = vunpack.c.l.b16 %v370
  %v393 = vunpack.c.l.b16 %v371
  %v394 = vunpack.c.l.b16 %v372
  %v395 = vpack.c.b16 %v392, %v391
  %v396 = vpack.c.b16 %v394, %v393
  %v397 = vrot.slane %v395, 6
  %v398 = vrot.slane %v396, 6
  %401 = vst [vmem:[#allocation3 + $0x40] sm:$0xcc] %v397
  %402 = vst [vmem:[#allocation3 + $0x48] sm:$0xcc] %v398
  %v403 = vld [vmem:[#allocation2] sm:$0xf]
  %v404 = vld [vmem:[#allocation2 + $0x8] sm:$0xf]
  %v405 = vld [vmem:[#allocation2 + $0x10] sm:$0xf]
  %v406 = vld [vmem:[#allocation2 + $0x18] sm:$0xf]
  %v407 = vld [vmem:[#allocation2] sm:$0xf0]
  %v408 = vld [vmem:[#allocation2 + $0x8] sm:$0xf0]
  %v409 = vld [vmem:[#allocation2 + $0x10] sm:$0xf0]
  %v410 = vld [vmem:[#allocation2 + $0x18] sm:$0xf0]
  %411 = vrot.lane.b32.xlu0 %v403, 16
  %v412 = vpop.permute.xlu0 %411
  %413 = vrot.lane.b32.xlu0 %v404, 16
  %v414 = vpop.permute.xlu0 %413
  %415 = vrot.lane.b32.xlu0 %v405, 16
  %v416 = vpop.permute.xlu0 %415
  %417 = vrot.lane.b32.xlu0 %v406, 16
  %v418 = vpop.permute.xlu0 %417
  %vm419 = vcmp.lt.s32.totalorder %v184, 16
  %v420 = vsel %vm419, %v416, %v418
  %v421 = vsel %vm419, %v414, %v416
  %v422 = vsel %vm419, %v412, %v414
  %v423 = vsel %vm419, %v418, %v412
  %v428 = vrot.slane %v407, 4
  %v429 = vrot.slane %v408, 4
  %v430 = vrot.slane %v409, 4
  %v431 = vrot.slane %v410, 4
  %436 = vrot.lane.b32.xlu0 %v428, 16
  %v437 = vpop.permute.xlu0 %436
  %438 = vrot.lane.b32.xlu0 %v429, 16
  %v439 = vpop.permute.xlu0 %438
  %440 = vrot.lane.b32.xlu0 %v430, 16
  %v441 = vpop.permute.xlu0 %440
  %442 = vrot.lane.b32.xlu0 %v431, 16
  %v443 = vpop.permute.xlu0 %442
  %v444 = vsel %vm419, %v441, %v443
  %v445 = vsel %vm419, %v439, %v441
  %v446 = vsel %vm419, %v437, %v439
  %v447 = vsel %vm419, %v443, %v437
  %v448 = vsel %vm284, 1, 0
  %v449 = vsel %vm285, 1, 0
  %v450 = vsel %vm286, 1, 0
  %v451 = vsel %vm287, 1, 0
  %vm452 = vcmp.eq.s32.totalorder %v448, 1
  %vm453 = vcmp.eq.s32.totalorder %v449, 1
  %vm454 = vcmp.eq.s32.totalorder %v450, 1
  %vm455 = vcmp.eq.s32.totalorder %v451, 1
  %v456 = vsel %vm452, %v423, 0.0
  %v457 = vsel %vm453, %v422, 0.0
  %v458 = vsel %vm454, %v421, 0.0
  %v459 = vsel %vm455, %v420, 0.0
  %v460 = vsel %vm452, %v447, 0.0
  %v461 = vsel %vm453, %v446, 0.0
  %v462 = vsel %vm454, %v445, 0.0
  %v463 = vsel %vm455, %v444, 0.0
  %v464 = vpack.c.bf16 %v456, %v456
  %v465 = vpack.c.bf16 %v457, %v457
  %v466 = vpack.c.bf16 %v458, %v458
  %v467 = vpack.c.bf16 %v459, %v459
  %v468 = vpack.c.bf16 %v460, %v460
  %v469 = vpack.c.bf16 %v461, %v461
  %v470 = vpack.c.bf16 %v462, %v462
  %v471 = vpack.c.bf16 %v463, %v463
  %v476 = vunpack.c.l.b16 %v464
  %v477 = vunpack.c.l.b16 %v465
  %v478 = vunpack.c.l.b16 %v466
  %v479 = vunpack.c.l.b16 %v467
  %v480 = vpack.c.b16 %v477, %v476
  %v481 = vpack.c.b16 %v479, %v478
  %v482 = vrot.slane %v480, 6
  %v483 = vrot.slane %v481, 6
  %486 = vst [vmem:[#allocation3] sm:$0xcc] %v482
  %487 = vst [vmem:[#allocation3 + $0x8] sm:$0xcc] %v483
  %v492 = vunpack.c.l.b16 %v468
  %v493 = vunpack.c.l.b16 %v469
  %v494 = vunpack.c.l.b16 %v470
  %v495 = vunpack.c.l.b16 %v471
  %v496 = vpack.c.b16 %v493, %v492
  %v497 = vpack.c.b16 %v495, %v494
  %500 = vst [vmem:[#allocation3 + $0x50] sm:$0x33] %v496
  %501 = vst [vmem:[#allocation3 + $0x58] sm:$0x33] %v497
  %v502 = vld [vmem:[#allocation2] sm:$0xf]
  %v503 = vld [vmem:[#allocation2 + $0x8] sm:$0xf]
  %v504 = vld [vmem:[#allocation2 + $0x10] sm:$0xf]
  %v505 = vld [vmem:[#allocation2 + $0x18] sm:$0xf]
  %v506 = vld [vmem:[#allocation2] sm:$0xf0]
  %v507 = vld [vmem:[#allocation2 + $0x8] sm:$0xf0]
  %v508 = vld [vmem:[#allocation2 + $0x10] sm:$0xf0]
  %v509 = vld [vmem:[#allocation2 + $0x18] sm:$0xf0]
  %510 = vrot.lane.b32.xlu0 %v502, 15
  %v511 = vpop.permute.xlu0 %510
  %512 = vrot.lane.b32.xlu0 %v503, 15
  %v513 = vpop.permute.xlu0 %512
  %514 = vrot.lane.b32.xlu0 %v504, 15
  %v515 = vpop.permute.xlu0 %514
  %516 = vrot.lane.b32.xlu0 %v505, 15
  %v517 = vpop.permute.xlu0 %516
  %vm518 = vcmp.lt.s32.totalorder %v184, 15
  %v519 = vsel %vm518, %v515, %v517
  %v520 = vsel %vm518, %v513, %v515
  %v521 = vsel %vm518, %v511, %v513
  %v522 = vsel %vm518, %v517, %v511
  %v527 = vrot.slane %v506, 4
  %v528 = vrot.slane %v507, 4
  %v529 = vrot.slane %v508, 4
  %v530 = vrot.slane %v509, 4
  %535 = vrot.lane.b32.xlu0 %v527, 15
  %v536 = vpop.permute.xlu0 %535
  %537 = vrot.lane.b32.xlu0 %v528, 15
  %v538 = vpop.permute.xlu0 %537
  %539 = vrot.lane.b32.xlu0 %v529, 15
  %v540 = vpop.permute.xlu0 %539
  %541 = vrot.lane.b32.xlu0 %v530, 15
  %v542 = vpop.permute.xlu0 %541
  %v543 = vsel %vm518, %v540, %v542
  %v544 = vsel %vm518, %v538, %v540
  %v545 = vsel %vm518, %v536, %v538
  %v546 = vsel %vm518, %v542, %v536
  %vm547 = vmand %vm284, %vm296
  %vm548 = vmand %vm285, %vm297
  %vm549 = vmand %vm286, %vm298
  %vm550 = vmand %vm287, %vm299
  %v551 = vsel %vm547, 1, 0
  %v552 = vsel %vm548, 1, 0
  %v553 = vsel %vm549, 1, 0
  %v554 = vsel %vm550, 1, 0
  %vm555 = vcmp.eq.s32.totalorder %v551, 1
  %vm556 = vcmp.eq.s32.totalorder %v552, 1
  %vm557 = vcmp.eq.s32.totalorder %v553, 1
  %vm558 = vcmp.eq.s32.totalorder %v554, 1
  %v559 = vsel %vm555, %v522, 0.0
  %v560 = vsel %vm556, %v521, 0.0
  %v561 = vsel %vm557, %v520, 0.0
  %v562 = vsel %vm558, %v519, 0.0
  %v563 = vsel %vm555, %v546, 0.0
  %v564 = vsel %vm556, %v545, 0.0
  %v565 = vsel %vm557, %v544, 0.0
  %v566 = vsel %vm558, %v543, 0.0
  %v567 = vpack.c.bf16 %v559, %v559
  %v568 = vpack.c.bf16 %v560, %v560
  %v569 = vpack.c.bf16 %v561, %v561
  %v570 = vpack.c.bf16 %v562, %v562
  %v571 = vpack.c.bf16 %v563, %v563
  %v572 = vpack.c.bf16 %v564, %v564
  %v573 = vpack.c.bf16 %v565, %v565
  %v574 = vpack.c.bf16 %v566, %v566
  %v579 = vunpack.c.l.b16 %v567
  %v580 = vunpack.c.l.b16 %v568
  %v581 = vunpack.c.l.b16 %v569
  %v582 = vunpack.c.l.b16 %v570
  %v583 = vpack.c.b16 %v580, %v579
  %v584 = vpack.c.b16 %v582, %v581
  %587 = vst [vmem:[#allocation3 + $0x10] sm:$0x33] %v583
  %588 = vst [vmem:[#allocation3 + $0x18] sm:$0x33] %v584
  %v593 = vunpack.c.l.b16 %v571
  %v594 = vunpack.c.l.b16 %v572
  %v595 = vunpack.c.l.b16 %v573
  %v596 = vunpack.c.l.b16 %v574
  %v597 = vpack.c.b16 %v594, %v593
  %v598 = vpack.c.b16 %v596, %v595
  %v599 = vrot.slane %v597, 6
  %v600 = vrot.slane %v598, 6
  %603 = vst [vmem:[#allocation3 + $0x50] sm:$0xcc] %v599
  %604 = vst [vmem:[#allocation3 + $0x58] sm:$0xcc] %v600
  %v605 = vld [vmem:[#allocation2] sm:$0xf]
  %v606 = vld [vmem:[#allocation2 + $0x8] sm:$0xf]
  %v607 = vld [vmem:[#allocation2 + $0x10] sm:$0xf]
  %v608 = vld [vmem:[#allocation2 + $0x18] sm:$0xf]
  %v609 = vld [vmem:[#allocation2] sm:$0xf0]
  %v610 = vld [vmem:[#allocation2 + $0x8] sm:$0xf0]
  %v611 = vld [vmem:[#allocation2 + $0x10] sm:$0xf0]
  %v612 = vld [vmem:[#allocation2 + $0x18] sm:$0xf0]
  %613 = vrot.lane.b32.xlu0 %v605, 1
  %v614 = vpop.permute.xlu0 %613
  %615 = vrot.lane.b32.xlu0 %v606, 1
  %v616 = vpop.permute.xlu0 %615
  %617 = vrot.lane.b32.xlu0 %v607, 1
  %v618 = vpop.permute.xlu0 %617
  %619 = vrot.lane.b32.xlu0 %v608, 1
  %v620 = vpop.permute.xlu0 %619
  %vm621 = vcmp.lt.s32.totalorder %v184, 1
  %v622 = vsel %vm621, %v618, %v620
  %v623 = vsel %vm621, %v616, %v618
  %v624 = vsel %vm621, %v614, %v616
  %v625 = vsel %vm621, %v620, %v614
  %v630 = vrot.slane %v609, 4
  %v631 = vrot.slane %v610, 4
  %v632 = vrot.slane %v611, 4
  %v633 = vrot.slane %v612, 4
  %638 = vrot.lane.b32.xlu0 %v630, 1
  %v639 = vpop.permute.xlu0 %638
  %640 = vrot.lane.b32.xlu0 %v631, 1
  %v641 = vpop.permute.xlu0 %640
  %642 = vrot.lane.b32.xlu0 %v632, 1
  %v643 = vpop.permute.xlu0 %642
  %644 = vrot.lane.b32.xlu0 %v633, 1
  %v645 = vpop.permute.xlu0 %644
  %v646 = vsel %vm621, %v643, %v645
  %v647 = vsel %vm621, %v641, %v643
  %v648 = vsel %vm621, %v639, %v641
  %v649 = vsel %vm621, %v645, %v639
  %v650 = vsel %vm292, 1, 0
  %v651 = vsel %vm293, 1, 0
  %v652 = vsel %vm294, 1, 0
  %v653 = vsel %vm295, 1, 0
  %vm654 = vcmp.eq.s32.totalorder %v650, 1
  %vm655 = vcmp.eq.s32.totalorder %v651, 1
  %vm656 = vcmp.eq.s32.totalorder %v652, 1
  %vm657 = vcmp.eq.s32.totalorder %v653, 1
  %v658 = vsel %vm654, %v625, 0.0
  %v659 = vsel %vm655, %v624, 0.0
  %v660 = vsel %vm656, %v623, 0.0
  %v661 = vsel %vm657, %v622, 0.0
  %v662 = vsel %vm654, %v649, 0.0
  %v663 = vsel %vm655, %v648, 0.0
  %v664 = vsel %vm656, %v647, 0.0
  %v665 = vsel %vm657, %v646, 0.0
  %v666 = vpack.c.bf16 %v658, %v658
  %v667 = vpack.c.bf16 %v659, %v659
  %v668 = vpack.c.bf16 %v660, %v660
  %v669 = vpack.c.bf16 %v661, %v661
  %v670 = vpack.c.bf16 %v662, %v662
  %v671 = vpack.c.bf16 %v663, %v663
  %v672 = vpack.c.bf16 %v664, %v664
  %v673 = vpack.c.bf16 %v665, %v665
  %v678 = vunpack.c.l.b16 %v666
  %v679 = vunpack.c.l.b16 %v667
  %v680 = vunpack.c.l.b16 %v668
  %v681 = vunpack.c.l.b16 %v669
  %v682 = vpack.c.b16 %v679, %v678
  %v683 = vpack.c.b16 %v681, %v680
  %v684 = vrot.slane %v682, 6
  %v685 = vrot.slane %v683, 6
  %688 = vst [vmem:[#allocation3 + $0x10] sm:$0xcc] %v684
  %689 = vst [vmem:[#allocation3 + $0x18] sm:$0xcc] %v685
  %v694 = vunpack.c.l.b16 %v670
  %v695 = vunpack.c.l.b16 %v671
  %v696 = vunpack.c.l.b16 %v672
  %v697 = vunpack.c.l.b16 %v673
  %v698 = vpack.c.b16 %v695, %v694
  %v699 = vpack.c.b16 %v697, %v696
  %702 = vst [vmem:[#allocation3 + $0x60] sm:$0x33] %v698
  %703 = vst [vmem:[#allocation3 + $0x68] sm:$0x33] %v699
  %v704 = vld [vmem:[#allocation2] sm:$0xf]
  %v705 = vld [vmem:[#allocation2 + $0x8] sm:$0xf]
  %v706 = vld [vmem:[#allocation2 + $0x10] sm:$0xf]
  %v707 = vld [vmem:[#allocation2 + $0x18] sm:$0xf]
  %v708 = vld [vmem:[#allocation2] sm:$0xf0]
  %v709 = vld [vmem:[#allocation2 + $0x8] sm:$0xf0]
  %v710 = vld [vmem:[#allocation2 + $0x10] sm:$0xf0]
  %v711 = vld [vmem:[#allocation2 + $0x18] sm:$0xf0]
  %v712 = vpack.c.bf16 %v704, %v704
  %v713 = vpack.c.bf16 %v705, %v705
  %v714 = vpack.c.bf16 %v706, %v706
  %v715 = vpack.c.bf16 %v707, %v707
  %v716 = vpack.c.bf16 %v708, %v708
  %v717 = vpack.c.bf16 %v709, %v709
  %v718 = vpack.c.bf16 %v710, %v710
  %v719 = vpack.c.bf16 %v711, %v711
  %v724 = vunpack.c.l.b16 %v712
  %v725 = vunpack.c.l.b16 %v713
  %v726 = vunpack.c.l.b16 %v714
  %v727 = vunpack.c.l.b16 %v715
  %v728 = vpack.c.b16 %v725, %v724
  %v729 = vpack.c.b16 %v727, %v726
  %732 = vst [vmem:[#allocation3 + $0x20] sm:$0x33] %v728
  %733 = vst [vmem:[#allocation3 + $0x28] sm:$0x33] %v729
  %v738 = vunpack.c.l.b16 %v716
  %v739 = vunpack.c.l.b16 %v717
  %v740 = vunpack.c.l.b16 %v718
  %v741 = vunpack.c.l.b16 %v719
  %v742 = vpack.c.b16 %v739, %v738
  %v743 = vpack.c.b16 %v741, %v740
  %746 = vst [vmem:[#allocation3 + $0x60] sm:$0xcc] %v742
  %747 = vst [vmem:[#allocation3 + $0x68] sm:$0xcc] %v743
  %v748 = vld [vmem:[#allocation2] sm:$0xf]
  %v749 = vld [vmem:[#allocation2 + $0x8] sm:$0xf]
  %v750 = vld [vmem:[#allocation2 + $0x10] sm:$0xf]
  %v751 = vld [vmem:[#allocation2 + $0x18] sm:$0xf]
  %v752 = vld [vmem:[#allocation2] sm:$0xf0]
  %v753 = vld [vmem:[#allocation2 + $0x8] sm:$0xf0]
  %v754 = vld [vmem:[#allocation2 + $0x10] sm:$0xf0]
  %v755 = vld [vmem:[#allocation2 + $0x18] sm:$0xf0]
  %756 = vrot.lane.b32.xlu0 %v748, 127
  %v757 = vpop.permute.xlu0 %756
  %758 = vrot.lane.b32.xlu0 %v749, 127
  %v759 = vpop.permute.xlu0 %758
  %760 = vrot.lane.b32.xlu0 %v750, 127
  %v761 = vpop.permute.xlu0 %760
  %762 = vrot.lane.b32.xlu0 %v751, 127
  %v763 = vpop.permute.xlu0 %762
  %vm764 = vcmp.lt.s32.totalorder %v184, 127
  %v765 = vsel %vm764, %v761, %v763
  %v766 = vsel %vm764, %v759, %v761
  %v767 = vsel %vm764, %v757, %v759
  %v768 = vsel %vm764, %v763, %v757
  %v773 = vrot.slane %v752, 4
  %v774 = vrot.slane %v753, 4
  %v775 = vrot.slane %v754, 4
  %v776 = vrot.slane %v755, 4
  %781 = vrot.lane.b32.xlu0 %v773, 127
  %v782 = vpop.permute.xlu0 %781
  %783 = vrot.lane.b32.xlu0 %v774, 127
  %v784 = vpop.permute.xlu0 %783
  %785 = vrot.lane.b32.xlu0 %v775, 127
  %v786 = vpop.permute.xlu0 %785
  %787 = vrot.lane.b32.xlu0 %v776, 127
  %v788 = vpop.permute.xlu0 %787
  %v789 = vsel %vm764, %v786, %v788
  %v790 = vsel %vm764, %v784, %v786
  %v791 = vsel %vm764, %v782, %v784
  %v792 = vsel %vm764, %v788, %v782
  %v793 = vsel %vm296, 1, 0
  %v794 = vsel %vm297, 1, 0
  %v795 = vsel %vm298, 1, 0
  %v796 = vsel %vm299, 1, 0
  %vm797 = vcmp.eq.s32.totalorder %v793, 1
  %vm798 = vcmp.eq.s32.totalorder %v794, 1
  %vm799 = vcmp.eq.s32.totalorder %v795, 1
  %vm800 = vcmp.eq.s32.totalorder %v796, 1
  %v801 = vsel %vm797, %v767, 0.0
  %v802 = vsel %vm798, %v766, 0.0
  %v803 = vsel %vm799, %v765, 0.0
  %v804 = vsel %vm800, %v768, 0.0
  %v805 = vsel %vm797, %v791, 0.0
  %v806 = vsel %vm798, %v790, 0.0
  %v807 = vsel %vm799, %v789, 0.0
  %v808 = vsel %vm800, %v792, 0.0
  %v809 = vpack.c.bf16 %v801, %v801
  %v810 = vpack.c.bf16 %v802, %v802
  %v811 = vpack.c.bf16 %v803, %v803
  %v812 = vpack.c.bf16 %v804, %v804
  %v813 = vpack.c.bf16 %v805, %v805
  %v814 = vpack.c.bf16 %v806, %v806
  %v815 = vpack.c.bf16 %v807, %v807
  %v816 = vpack.c.bf16 %v808, %v808
  %v821 = vunpack.c.l.b16 %v809
  %v822 = vunpack.c.l.b16 %v810
  %v823 = vunpack.c.l.b16 %v811
  %v824 = vunpack.c.l.b16 %v812
  %v825 = vpack.c.b16 %v822, %v821
  %v826 = vpack.c.b16 %v824, %v823
  %v827 = vrot.slane %v825, 6
  %v828 = vrot.slane %v826, 6
  %831 = vst [vmem:[#allocation3 + $0x20] sm:$0xcc] %v827
  %832 = vst [vmem:[#allocation3 + $0x28] sm:$0xcc] %v828
  %v837 = vunpack.c.l.b16 %v813
  %v838 = vunpack.c.l.b16 %v814
  %v839 = vunpack.c.l.b16 %v815
  %v840 = vunpack.c.l.b16 %v816
  %v841 = vpack.c.b16 %v838, %v837
  %v842 = vpack.c.b16 %v840, %v839
  %845 = vst [vmem:[#allocation3 + $0x70] sm:$0x33] %v841
  %846 = vst [vmem:[#allocation3 + $0x78] sm:$0x33] %v842
  %v847 = vld [vmem:[#allocation2] sm:$0xf]
  %v848 = vld [vmem:[#allocation2 + $0x8] sm:$0xf]
  %v849 = vld [vmem:[#allocation2 + $0x10] sm:$0xf]
  %v850 = vld [vmem:[#allocation2 + $0x18] sm:$0xf]
  %v851 = vld [vmem:[#allocation2] sm:$0xf0]
  %v852 = vld [vmem:[#allocation2 + $0x8] sm:$0xf0]
  %v853 = vld [vmem:[#allocation2 + $0x10] sm:$0xf0]
  %v854 = vld [vmem:[#allocation2 + $0x18] sm:$0xf0]
  %855 = vrot.lane.b32.xlu0 %v847, 113
  %v856 = vpop.permute.xlu0 %855
  %857 = vrot.lane.b32.xlu0 %v848, 113
  %v858 = vpop.permute.xlu0 %857
  %859 = vrot.lane.b32.xlu0 %v849, 113
  %v860 = vpop.permute.xlu0 %859
  %861 = vrot.lane.b32.xlu0 %v850, 113
  %v862 = vpop.permute.xlu0 %861
  %vm863 = vcmp.lt.s32.totalorder %v184, 113
  %v864 = vsel %vm863, %v860, %v862
  %v865 = vsel %vm863, %v858, %v860
  %v866 = vsel %vm863, %v856, %v858
  %v867 = vsel %vm863, %v862, %v856
  %v872 = vrot.slane %v851, 4
  %v873 = vrot.slane %v852, 4
  %v874 = vrot.slane %v853, 4
  %v875 = vrot.slane %v854, 4
  %880 = vrot.lane.b32.xlu0 %v872, 113
  %v881 = vpop.permute.xlu0 %880
  %882 = vrot.lane.b32.xlu0 %v873, 113
  %v883 = vpop.permute.xlu0 %882
  %884 = vrot.lane.b32.xlu0 %v874, 113
  %v885 = vpop.permute.xlu0 %884
  %886 = vrot.lane.b32.xlu0 %v875, 113
  %v887 = vpop.permute.xlu0 %886
  %v888 = vsel %vm863, %v885, %v887
  %v889 = vsel %vm863, %v883, %v885
  %v890 = vsel %vm863, %v881, %v883
  %v891 = vsel %vm863, %v887, %v881
  %vm892 = vmand %vm288, %vm292
  %vm893 = vmand %vm289, %vm293
  %vm894 = vmand %vm290, %vm294
  %vm895 = vmand %vm291, %vm295
  %v896 = vsel %vm892, 1, 0
  %v897 = vsel %vm893, 1, 0
  %v898 = vsel %vm894, 1, 0
  %v899 = vsel %vm895, 1, 0
  %vm900 = vcmp.eq.s32.totalorder %v896, 1
  %vm901 = vcmp.eq.s32.totalorder %v897, 1
  %vm902 = vcmp.eq.s32.totalorder %v898, 1
  %vm903 = vcmp.eq.s32.totalorder %v899, 1
  %v904 = vsel %vm900, %v866, 0.0
  %v905 = vsel %vm901, %v865, 0.0
  %v906 = vsel %vm902, %v864, 0.0
  %v907 = vsel %vm903, %v867, 0.0
  %v908 = vsel %vm900, %v890, 0.0
  %v909 = vsel %vm901, %v889, 0.0
  %v910 = vsel %vm902, %v888, 0.0
  %v911 = vsel %vm903, %v891, 0.0
  %v912 = vpack.c.bf16 %v904, %v904
  %v913 = vpack.c.bf16 %v905, %v905
  %v914 = vpack.c.bf16 %v906, %v906
  %v915 = vpack.c.bf16 %v907, %v907
  %v916 = vpack.c.bf16 %v908, %v908
  %v917 = vpack.c.bf16 %v909, %v909
  %v918 = vpack.c.bf16 %v910, %v910
  %v919 = vpack.c.bf16 %v911, %v911
  %v924 = vunpack.c.l.b16 %v912
  %v925 = vunpack.c.l.b16 %v913
  %v926 = vunpack.c.l.b16 %v914
  %v927 = vunpack.c.l.b16 %v915
  %v928 = vpack.c.b16 %v925, %v924
  %v929 = vpack.c.b16 %v927, %v926
  %932 = vst [vmem:[#allocation3 + $0x30] sm:$0x33] %v928
  %933 = vst [vmem:[#allocation3 + $0x38] sm:$0x33] %v929
  %v938 = vunpack.c.l.b16 %v916
  %v939 = vunpack.c.l.b16 %v917
  %v940 = vunpack.c.l.b16 %v918
  %v941 = vunpack.c.l.b16 %v919
  %v942 = vpack.c.b16 %v939, %v938
  %v943 = vpack.c.b16 %v941, %v940
  %v944 = vrot.slane %v942, 6
  %v945 = vrot.slane %v943, 6
  %948 = vst [vmem:[#allocation3 + $0x70] sm:$0xcc] %v944
  %949 = vst [vmem:[#allocation3 + $0x78] sm:$0xcc] %v945
  %v950 = vld [vmem:[#allocation2] sm:$0xf]
  %v951 = vld [vmem:[#allocation2 + $0x8] sm:$0xf]
  %v952 = vld [vmem:[#allocation2 + $0x10] sm:$0xf]
  %v953 = vld [vmem:[#allocation2 + $0x18] sm:$0xf]
  %v954 = vld [vmem:[#allocation2] sm:$0xf0]
  %v955 = vld [vmem:[#allocation2 + $0x8] sm:$0xf0]
  %v956 = vld [vmem:[#allocation2 + $0x10] sm:$0xf0]
  %v957 = vld [vmem:[#allocation2 + $0x18] sm:$0xf0]
  %958 = vrot.lane.b32.xlu0 %v950, 112
  %v959 = vpop.permute.xlu0 %958
  %960 = vrot.lane.b32.xlu0 %v951, 112
  %v961 = vpop.permute.xlu0 %960
  %962 = vrot.lane.b32.xlu0 %v952, 112
  %v963 = vpop.permute.xlu0 %962
  %964 = vrot.lane.b32.xlu0 %v953, 112
  %v965 = vpop.permute.xlu0 %964
  %vm966 = vcmp.lt.s32.totalorder %v184, 112
  %v967 = vsel %vm966, %v963, %v965
  %v968 = vsel %vm966, %v961, %v963
  %v969 = vsel %vm966, %v959, %v961
  %v970 = vsel %vm966, %v965, %v959
  %v975 = vrot.slane %v954, 4
  %v976 = vrot.slane %v955, 4
  %v977 = vrot.slane %v956, 4
  %v978 = vrot.slane %v957, 4
  %983 = vrot.lane.b32.xlu0 %v975, 112
  %v984 = vpop.permute.xlu0 %983
  %985 = vrot.lane.b32.xlu0 %v976, 112
  %v986 = vpop.permute.xlu0 %985
  %987 = vrot.lane.b32.xlu0 %v977, 112
  %v988 = vpop.permute.xlu0 %987
  %989 = vrot.lane.b32.xlu0 %v978, 112
  %v990 = vpop.permute.xlu0 %989
  %v991 = vsel %vm966, %v988, %v990
  %v992 = vsel %vm966, %v986, %v988
  %v993 = vsel %vm966, %v984, %v986
  %v994 = vsel %vm966, %v990, %v984
  %v995 = vsel %vm288, 1, 0
  %v996 = vsel %vm289, 1, 0
  %v997 = vsel %vm290, 1, 0
  %v998 = vsel %vm291, 1, 0
  %vm999 = vcmp.eq.s32.totalorder %v995, 1
  %vm1000 = vcmp.eq.s32.totalorder %v996, 1
  %vm1001 = vcmp.eq.s32.totalorder %v997, 1
  %vm1002 = vcmp.eq.s32.totalorder %v998, 1
  %v1003 = vsel %vm999, %v969, 0.0
  %v1004 = vsel %vm1000, %v968, 0.0
  %v1005 = vsel %vm1001, %v967, 0.0
  %v1006 = vsel %vm1002, %v970, 0.0
  %v1007 = vsel %vm999, %v993, 0.0
  %v1008 = vsel %vm1000, %v992, 0.0
  %v1009 = vsel %vm1001, %v991, 0.0
  %v1010 = vsel %vm1002, %v994, 0.0
  %v1011 = vpack.c.bf16 %v1003, %v1003
  %v1012 = vpack.c.bf16 %v1004, %v1004
  %v1013 = vpack.c.bf16 %v1005, %v1005
  %v1014 = vpack.c.bf16 %v1006, %v1006
  %v1015 = vpack.c.bf16 %v1007, %v1007
  %v1016 = vpack.c.bf16 %v1008, %v1008
  %v1017 = vpack.c.bf16 %v1009, %v1009
  %v1018 = vpack.c.bf16 %v1010, %v1010
  %v1023 = vunpack.c.l.b16 %v1011
  %v1024 = vunpack.c.l.b16 %v1012
  %v1025 = vunpack.c.l.b16 %v1013
  %v1026 = vunpack.c.l.b16 %v1014
  %v1027 = vpack.c.b16 %v1024, %v1023
  %v1028 = vpack.c.b16 %v1026, %v1025
  %v1029 = vrot.slane %v1027, 6
  %v1030 = vrot.slane %v1028, 6
  %1033 = vst [vmem:[#allocation3 + $0x30] sm:$0xcc] %v1029
  %1034 = vst [vmem:[#allocation3 + $0x38] sm:$0xcc] %v1030
  %v1039 = vunpack.c.l.b16 %v1015
  %v1040 = vunpack.c.l.b16 %v1016
  %v1041 = vunpack.c.l.b16 %v1017
  %v1042 = vunpack.c.l.b16 %v1018
  %v1043 = vpack.c.b16 %v1040, %v1039
  %v1044 = vpack.c.b16 %v1042, %v1041
  %1047 = vst [vmem:[#allocation3 + $0x80] sm:$0x33] %v1043
  %1048 = vst [vmem:[#allocation3 + $0x88] sm:$0x33] %v1044
  %v1049 = vld [vmem:[#allocation2] sm:$0xf]
  %v1050 = vld [vmem:[#allocation2 + $0x8] sm:$0xf]
  %v1051 = vld [vmem:[#allocation2 + $0x10] sm:$0xf]
  %v1052 = vld [vmem:[#allocation2 + $0x18] sm:$0xf]
  %v1053 = vld [vmem:[#allocation2] sm:$0xf0]
  %v1054 = vld [vmem:[#allocation2 + $0x8] sm:$0xf0]
  %v1055 = vld [vmem:[#allocation2 + $0x10] sm:$0xf0]
  %v1056 = vld [vmem:[#allocation2 + $0x18] sm:$0xf0]
  %1057 = vrot.lane.b32.xlu0 %v1049, 111
  %v1058 = vpop.permute.xlu0 %1057
  %1059 = vrot.lane.b32.xlu0 %v1050, 111
  %v1060 = vpop.permute.xlu0 %1059
  %1061 = vrot.lane.b32.xlu0 %v1051, 111
  %v1062 = vpop.permute.xlu0 %1061
  %1063 = vrot.lane.b32.xlu0 %v1052, 111
  %v1064 = vpop.permute.xlu0 %1063
  %vm1065 = vcmp.lt.s32.totalorder %v184, 111
  %v1066 = vsel %vm1065, %v1062, %v1064
  %v1067 = vsel %vm1065, %v1060, %v1062
  %v1068 = vsel %vm1065, %v1058, %v1060
  %v1069 = vsel %vm1065, %v1064, %v1058
  %v1074 = vrot.slane %v1053, 4
  %v1075 = vrot.slane %v1054, 4
  %v1076 = vrot.slane %v1055, 4
  %v1077 = vrot.slane %v1056, 4
  %1082 = vrot.lane.b32.xlu0 %v1074, 111
  %v1083 = vpop.permute.xlu0 %1082
  %1084 = vrot.lane.b32.xlu0 %v1075, 111
  %v1085 = vpop.permute.xlu0 %1084
  %1086 = vrot.lane.b32.xlu0 %v1076, 111
  %v1087 = vpop.permute.xlu0 %1086
  %1088 = vrot.lane.b32.xlu0 %v1077, 111
  %v1089 = vpop.permute.xlu0 %1088
  %v1090 = vsel %vm1065, %v1087, %v1089
  %v1091 = vsel %vm1065, %v1085, %v1087
  %v1092 = vsel %vm1065, %v1083, %v1085
  %v1093 = vsel %vm1065, %v1089, %v1083
  %vm1094 = vmand %vm288, %vm296
  %vm1095 = vmand %vm289, %vm297
  %vm1096 = vmand %vm290, %vm298
  %vm1097 = vmand %vm291, %vm299
  %v1098 = vsel %vm1094, 1, 0
  %v1099 = vsel %vm1095, 1, 0
  %v1100 = vsel %vm1096, 1, 0
  %v1101 = vsel %vm1097, 1, 0
  %vm1102 = vcmp.eq.s32.totalorder %v1098, 1
  %vm1103 = vcmp.eq.s32.totalorder %v1099, 1
  %vm1104 = vcmp.eq.s32.totalorder %v1100, 1
  %vm1105 = vcmp.eq.s32.totalorder %v1101, 1
  %v1106 = vsel %vm1102, %v1068, 0.0
  %v1107 = vsel %vm1103, %v1067, 0.0
  %v1108 = vsel %vm1104, %v1066, 0.0
  %v1109 = vsel %vm1105, %v1069, 0.0
  %v1110 = vsel %vm1102, %v1092, 0.0
  %v1111 = vsel %vm1103, %v1091, 0.0
  %v1112 = vsel %vm1104, %v1090, 0.0
  %v1113 = vsel %vm1105, %v1093, 0.0
  %v1114 = vpack.c.bf16 %v1106, %v1106
  %v1115 = vpack.c.bf16 %v1107, %v1107
  %v1116 = vpack.c.bf16 %v1108, %v1108
  %v1117 = vpack.c.bf16 %v1109, %v1109
  %v1118 = vpack.c.bf16 %v1110, %v1110
  %v1119 = vpack.c.bf16 %v1111, %v1111
  %v1120 = vpack.c.bf16 %v1112, %v1112
  %v1121 = vpack.c.bf16 %v1113, %v1113
  %v1126 = vunpack.c.l.b16 %v1114
  %v1127 = vunpack.c.l.b16 %v1115
  %v1128 = vunpack.c.l.b16 %v1116
  %v1129 = vunpack.c.l.b16 %v1117
  %v1130 = vpack.c.b16 %v1127, %v1126
  %v1131 = vpack.c.b16 %v1129, %v1128
  %1134 = vst [vmem:[#allocation3 + $0x40] sm:$0x33] %v1130
  %1135 = vst [vmem:[#allocation3 + $0x48] sm:$0x33] %v1131
  %v1140 = vunpack.c.l.b16 %v1118
  %v1141 = vunpack.c.l.b16 %v1119
  %v1142 = vunpack.c.l.b16 %v1120
  %v1143 = vunpack.c.l.b16 %v1121
  %v1144 = vpack.c.b16 %v1141, %v1140
  %v1145 = vpack.c.b16 %v1143, %v1142
  %v1146 = vrot.slane %v1144, 6
  %v1147 = vrot.slane %v1145, 6
  %1150 = vst [vmem:[#allocation3 + $0x80] sm:$0xcc] %v1146
  %1151 = vst [vmem:[#allocation3 + $0x88] sm:$0xcc] %v1147
  %v1152 = vld [vmem:[%s3] sm:$0x3]
  %v1153 = vld [vmem:[#allocation3] sm:$0xff]
  %v1154 = vld [vmem:[#allocation3 + $0x8] sm:$0xff]
  %v1155 = vld [vmem:[#allocation3 + $0x10] sm:$0xff]
  %v1156 = vld [vmem:[#allocation3 + $0x18] sm:$0xff]
  %v1157 = vld [vmem:[#allocation3 + $0x20] sm:$0xff]
  %v1158 = vld [vmem:[#allocation3 + $0x28] sm:$0xff]
  %v1159 = vld [vmem:[#allocation3 + $0x30] sm:$0xff]
  %v1160 = vld [vmem:[#allocation3 + $0x38] sm:$0xff]
  %v1161 = vld [vmem:[#allocation3 + $0x40] sm:$0x33]
  %v1162 = vld [vmem:[#allocation3 + $0x48] sm:$0x33]
  %v1163 = vld [vmem:[%s3] sm:$0xc]
  %v1164 = vld [vmem:[#allocation3 + $0x40] sm:$0xcc]
  %v1165 = vld [vmem:[#allocation3 + $0x48] sm:$0xcc]
  %v1166 = vld [vmem:[#allocation3 + $0x50] sm:$0xff]
  %v1167 = vld [vmem:[#allocation3 + $0x58] sm:$0xff]
  %v1168 = vld [vmem:[#allocation3 + $0x60] sm:$0xff]
  %v1169 = vld [vmem:[#allocation3 + $0x68] sm:$0xff]
  %v1170 = vld [vmem:[#allocation3 + $0x70] sm:$0xff]
  %v1171 = vld [vmem:[#allocation3 + $0x78] sm:$0xff]
  %v1172 = vld [vmem:[#allocation3 + $0x80] sm:$0xff]
  %v1173 = vld [vmem:[#allocation3 + $0x88] sm:$0xff]
  %v1174 = vld [vmem:[%s4] sm:$0xf]
  %1176 = vset.pattern.permute.xlu0 0
  %1177 = vperm.xlu0 %1176, %v1174
  %v1178 = vpop.permute.xlu0 %1177
  %v1190 = vunpack.c.l.b16 %v1153
  %v1191 = vunpack.c.h.b16 %v1153
  %v1192 = vunpack.c.l.b16 %v1154
  %v1193 = vunpack.c.h.b16 %v1154
  %v1194 = vunpack.c.l.b16 %v1155
  %v1195 = vunpack.c.h.b16 %v1155
  %v1196 = vunpack.c.l.b16 %v1156
  %v1197 = vunpack.c.h.b16 %v1156
  %v1198 = vunpack.c.l.b16 %v1157
  %v1199 = vunpack.c.h.b16 %v1157
  %v1200 = vunpack.c.l.b16 %v1158
  %v1201 = vunpack.c.h.b16 %v1158
  %v1202 = vunpack.c.l.b16 %v1159
  %v1203 = vunpack.c.h.b16 %v1159
  %v1204 = vunpack.c.l.b16 %v1160
  %v1205 = vunpack.c.h.b16 %v1160
  %v1206 = vunpack.c.l.b16 %v1161
  %v1207 = vunpack.c.h.b16 %v1161
  %v1208 = vunpack.c.l.b16 %v1162
  %v1209 = vunpack.c.h.b16 %v1162
  %v1210 = vpack.c.b16 %v1194, %v1190
  %v1211 = vpack.c.b16 %v1195, %v1191
  %v1212 = vpack.c.b16 %v1196, %v1192
  %v1213 = vpack.c.b16 %v1197, %v1193
  %v1214 = vpack.c.b16 %v1202, %v1198
  %v1215 = vpack.c.b16 %v1203, %v1199
  %v1216 = vpack.c.b16 %v1204, %v1200
  %v1217 = vpack.c.b16 %v1205, %v1201
  %v1218 = vpack.c.b16 %v1206, %v1206
  %v1219 = vpack.c.b16 %v1207, %v1207
  %v1220 = vpack.c.b16 %v1208, %v1208
  %v1221 = vpack.c.b16 %v1209, %v1209
  %vm1230 = vcmask 293888
  %v1232 = vsel %vm1230, %v1152, 0
  %v1235 = vsel %vm44, %v1218, 0
  %v1238 = vsel %vm44, %v1219, 0
  %v1241 = vsel %vm44, %v1220, 0
  %v1244 = vsel %vm44, %v1221, 0
  %1246 = vmatprep.subr.bf16.mxu0 %v1211
  %1247 = vmatpush1.bf16.msra.mxu0 %v1210
  %1248 = vmatprep.subr.bf16.mxu0 %v1215
  %1249 = vmatpush1.bf16.msra.mxu0 %v1214
  %1250 = vmatprep.subr.bf16.mxu0 %v1238
  %1251 = vmatpush1.bf16.msra.mxu0 %v1235
  %1252 = vmatprep.subr.bf16.mxu0 0
  %1253 = vmatpush1.bf16.msra.mxu0 0
  %1254 = vmatprep.subr.bf16.mxu0 0
  %1255 = vmatpush1.bf16.msra.mxu0 0
  %1256 = vmatprep.subr.bf16.mxu0 0
  %1257 = vmatpush1.bf16.msra.mxu0 0
  %1258 = vmatprep.subr.bf16.mxu0 0
  %1259 = vmatpush1.bf16.msra.mxu0 0
  %1260 = vmatprep.subr.bf16.mxu0 0
  %1261 = vmatpush1.bf16.msra.mxu0 0
  %1262 = vmatprep.subr.bf16.mxu0 0
  %1263 = vmatpush1.bf16.msra.mxu0 0
  %1264 = vmatprep.subr.bf16.mxu0 0
  %1265 = vmatpush1.bf16.msra.mxu0 0
  %1266 = vmatprep.subr.bf16.mxu0 0
  %1267 = vmatpush1.bf16.msra.mxu0 0
  %1268 = vmatprep.subr.bf16.mxu0 0
  %1269 = vmatpush1.bf16.msra.mxu0 0
  %1270 = vmatprep.subr.bf16.mxu0 0
  %1271 = vmatpush1.bf16.msra.mxu0 0
  %1272 = vmatprep.subr.bf16.mxu0 0
  %1273 = vmatpush1.bf16.msra.mxu0 0
  %1274 = vmatprep.subr.bf16.mxu0 0
  %1275 = vmatpush1.bf16.msra.mxu0 0
  %1276 = vmatprep.subr.bf16.mxu0 0
  %1277 = vmatpush1.bf16.msra.mxu0 0
  %1278 = vmatprep.mubr.bf16.mxu0 0
  %1279 = vmatmul.mubr.bf16.gmra.mrb[0].mxu0 %v1232
  %v1280 = vpop.f32.mrb[0].mxu0
  %v1281 = vadd.f32 %v1178, %v1280
  %v1282 = vpop.f32.mrb[0].mxu0
  %v1283 = vadd.f32 %v1178, %v1282
  %v1284 = vpop.f32.mrb[0].mxu0
  %v1285 = vpop.f32.mrb[0].mxu0
  %1286 = vdwg.mxu0
  %1287 = vmatprep.subr.bf16.mxu0 %v1213
  %1288 = vmatpush1.bf16.msra.mxu0 %v1212
  %1289 = vmatprep.subr.bf16.mxu0 %v1217
  %1290 = vmatpush1.bf16.msra.mxu0 %v1216
  %1291 = vmatprep.subr.bf16.mxu0 %v1244
  %1292 = vmatpush1.bf16.msra.mxu0 %v1241
  %1293 = vmatprep.subr.bf16.mxu0 0
  %1294 = vmatpush1.bf16.msra.mxu0 0
  %1295 = vmatprep.subr.bf16.mxu0 0
  %1296 = vmatpush1.bf16.msra.mxu0 0
  %1297 = vmatprep.subr.bf16.mxu0 0
  %1298 = vmatpush1.bf16.msra.mxu0 0
  %1299 = vmatprep.subr.bf16.mxu0 0
  %1300 = vmatpush1.bf16.msra.mxu0 0
  %1301 = vmatprep.subr.bf16.mxu0 0
  %1302 = vmatpush1.bf16.msra.mxu0 0
  %1303 = vmatprep.subr.bf16.mxu0 0
  %1304 = vmatpush1.bf16.msra.mxu0 0
  %1305 = vmatprep.subr.bf16.mxu0 0
  %1306 = vmatpush1.bf16.msra.mxu0 0
  %1307 = vmatprep.subr.bf16.mxu0 0
  %1308 = vmatpush1.bf16.msra.mxu0 0
  %1309 = vmatprep.subr.bf16.mxu0 0
  %1310 = vmatpush1.bf16.msra.mxu0 0
  %1311 = vmatprep.subr.bf16.mxu0 0
  %1312 = vmatpush1.bf16.msra.mxu0 0
  %1313 = vmatprep.subr.bf16.mxu0 0
  %1314 = vmatpush1.bf16.msra.mxu0 0
  %1315 = vmatprep.subr.bf16.mxu0 0
  %1316 = vmatpush1.bf16.msra.mxu0 0
  %1317 = vmatprep.subr.bf16.mxu0 0
  %1318 = vmatpush1.bf16.msra.mxu0 0
  %1319 = vmatprep.mubr.bf16.mxu0 0
  %1320 = vmatmul.mubr.bf16.gmra.mrb[0].mxu0 %v1232
  %v1321 = vpop.f32.mrb[0].mxu0
  %v1322 = vadd.f32 %v1178, %v1321
  %v1323 = vpop.f32.mrb[0].mxu0
  %v1324 = vadd.f32 %v1178, %v1323
  %v1325 = vpop.f32.mrb[0].mxu0
  %v1326 = vpop.f32.mrb[0].mxu0
  %1327 = vdwg.mxu0
  %v1328 = vsub.f32 0.0, %v1281
  %v1329 = vsub.f32 0.0, %v1283
  %v1330 = vsub.f32 0.0, %v1322
  %v1331 = vsub.f32 0.0, %v1324
  %v1332 = vmul.f32 %v1328, 1.442695
  %v1333 = vpow.pop %v1332
  %v1334 = vmul.f32 %v1329, 1.442695
  %v1335 = vpow.pop %v1334
  %v1336 = vmul.f32 %v1330, 1.442695
  %v1337 = vpow.pop %v1336
  %v1338 = vmul.f32 %v1331, 1.442695
  %v1339 = vpow.pop %v1338
  %v1340 = vadd.f32 %v1333, 1.0
  %v1341 = vadd.f32 %v1335, 1.0
  %v1342 = vadd.f32 %v1337, 1.0
  %v1343 = vadd.f32 %v1339, 1.0
  %v1344 = vrcp.pop %v1340
  %v1345 = vrcp.pop %v1341
  %v1346 = vrcp.pop %v1342
  %v1347 = vrcp.pop %v1343
  %v1348 = vmul.f32 %v1281, %v1344
  %v1349 = vmul.f32 %v1283, %v1345
  %v1350 = vmul.f32 %v1322, %v1346
  %v1351 = vmul.f32 %v1324, %v1347
  %1352 = vst [vmem:[%s5] sm:$0xf] %v1348
  %1353 = vst [vmem:[%s5 + $0x8] sm:$0xf] %v1349
  %1354 = vst [vmem:[%s5 + $0x10] sm:$0xf] %v1350
  %1355 = vst [vmem:[%s5 + $0x18] sm:$0xf] %v1351
  %v1356 = vld [vmem:[%s4 + $0x4] sm:$0xf]
  %1358 = vset.pattern.permute.xlu0 0
  %1359 = vperm.xlu0 %1358, %v1356
  %v1360 = vpop.permute.xlu0 %1359
  %v1363 = vunpack.c.l.b16 %v1163
  %v1364 = vpack.c.b16 %v1363, %v1363
  %v1365 = vrot.slane %v1364, 2
  %v1376 = vunpack.c.l.b16 %v1164
  %v1377 = vunpack.c.h.b16 %v1164
  %v1378 = vunpack.c.l.b16 %v1165
  %v1379 = vunpack.c.h.b16 %v1165
  %v1380 = vunpack.c.l.b16 %v1166
  %v1381 = vunpack.c.h.b16 %v1166
  %v1382 = vunpack.c.l.b16 %v1167
  %v1383 = vunpack.c.h.b16 %v1167
  %v1384 = vunpack.c.l.b16 %v1168
  %v1385 = vunpack.c.h.b16 %v1168
  %v1386 = vunpack.c.l.b16 %v1169
  %v1387 = vunpack.c.h.b16 %v1169
  %v1388 = vunpack.c.l.b16 %v1170
  %v1389 = vunpack.c.h.b16 %v1170
  %v1390 = vunpack.c.l.b16 %v1171
  %v1391 = vunpack.c.h.b16 %v1171
  %v1392 = vunpack.c.l.b16 %v1172
  %v1393 = vunpack.c.h.b16 %v1172
  %v1394 = vunpack.c.l.b16 %v1173
  %v1395 = vunpack.c.h.b16 %v1173
  %v1396 = vpack.c.b16 %v1380, %v1376
  %v1397 = vpack.c.b16 %v1381, %v1377
  %v1398 = vpack.c.b16 %v1382, %v1378
  %v1399 = vpack.c.b16 %v1383, %v1379
  %v1400 = vpack.c.b16 %v1388, %v1384
  %v1401 = vpack.c.b16 %v1389, %v1385
  %v1402 = vpack.c.b16 %v1390, %v1386
  %v1403 = vpack.c.b16 %v1391, %v1387
  %v1404 = vpack.c.b16 %v1392, %v1392
  %v1405 = vpack.c.b16 %v1393, %v1393
  %v1406 = vpack.c.b16 %v1394, %v1394
  %v1407 = vpack.c.b16 %v1395, %v1395
  %vm1408 = vcmask 1045504
  %v1409 = vrot.slane %v1396, 2
  %v1410 = vrot.slane %v1400, 2
  %v1411 = vsel %vm1408, %v1409, %v1410
  %v1412 = vrot.slane %v1397, 2
  %v1413 = vrot.slane %v1401, 2
  %v1414 = vsel %vm1408, %v1412, %v1413
  %v1415 = vrot.slane %v1398, 2
  %v1416 = vrot.slane %v1402, 2
  %v1417 = vsel %vm1408, %v1415, %v1416
  %v1418 = vrot.slane %v1399, 2
  %v1419 = vrot.slane %v1403, 2
  %v1420 = vsel %vm1408, %v1418, %v1419
  %v1421 = vrot.slane %v1404, 2
  %v1422 = vsel %vm1408, %v1410, %v1421
  %v1423 = vrot.slane %v1405, 2
  %v1424 = vsel %vm1408, %v1413, %v1423
  %v1425 = vrot.slane %v1406, 2
  %v1426 = vsel %vm1408, %v1416, %v1425
  %v1427 = vrot.slane %v1407, 2
  %v1428 = vsel %vm1408, %v1419, %v1427
  %v1438 = vsel %vm1230, %v1365, 0
  %v1441 = vsel %vm44, %v1421, 0
  %v1444 = vsel %vm44, %v1423, 0
  %v1447 = vsel %vm44, %v1425, 0
  %v1450 = vsel %vm44, %v1427, 0
  %1452 = vmatprep.subr.bf16.mxu0 %v1414
  %1453 = vmatpush1.bf16.msra.mxu0 %v1411
  %1454 = vmatprep.subr.bf16.mxu0 %v1424
  %1455 = vmatpush1.bf16.msra.mxu0 %v1422
  %1456 = vmatprep.subr.bf16.mxu0 %v1444
  %1457 = vmatpush1.bf16.msra.mxu0 %v1441
  %1458 = vmatprep.subr.bf16.mxu0 0
  %1459 = vmatpush1.bf16.msra.mxu0 0
  %1460 = vmatprep.subr.bf16.mxu0 0
  %1461 = vmatpush1.bf16.msra.mxu0 0
  %1462 = vmatprep.subr.bf16.mxu0 0
  %1463 = vmatpush1.bf16.msra.mxu0 0
  %1464 = vmatprep.subr.bf16.mxu0 0
  %1465 = vmatpush1.bf16.msra.mxu0 0
  %1466 = vmatprep.subr.bf16.mxu0 0
  %1467 = vmatpush1.bf16.msra.mxu0 0
  %1468 = vmatprep.subr.bf16.mxu0 0
  %1469 = vmatpush1.bf16.msra.mxu0 0
  %1470 = vmatprep.subr.bf16.mxu0 0
  %1471 = vmatpush1.bf16.msra.mxu0 0
  %1472 = vmatprep.subr.bf16.mxu0 0
  %1473 = vmatpush1.bf16.msra.mxu0 0
  %1474 = vmatprep.subr.bf16.mxu0 0
  %1475 = vmatpush1.bf16.msra.mxu0 0
  %1476 = vmatprep.subr.bf16.mxu0 0
  %1477 = vmatpush1.bf16.msra.mxu0 0
  %1478 = vmatprep.subr.bf16.mxu0 0
  %1479 = vmatpush1.bf16.msra.mxu0 0
  %1480 = vmatprep.subr.bf16.mxu0 0
  %1481 = vmatpush1.bf16.msra.mxu0 0
  %1482 = vmatprep.subr.bf16.mxu0 0
  %1483 = vmatpush1.bf16.msra.mxu0 0
  %1484 = vmatprep.mubr.bf16.mxu0 0
  %1485 = vmatmul.mubr.bf16.gmra.mrb[0].mxu0 %v1438
  %v1486 = vpop.f32.mrb[0].mxu0
  %v1487 = vadd.f32 %v1360, %v1486
  %v1488 = vpop.f32.mrb[0].mxu0
  %v1489 = vadd.f32 %v1360, %v1488
  %v1490 = vpop.f32.mrb[0].mxu0
  %v1491 = vpop.f32.mrb[0].mxu0
  %1492 = vdwg.mxu0
  %1493 = vmatprep.subr.bf16.mxu0 %v1420
  %1494 = vmatpush1.bf16.msra.mxu0 %v1417
  %1495 = vmatprep.subr.bf16.mxu0 %v1428
  %1496 = vmatpush1.bf16.msra.mxu0 %v1426
  %1497 = vmatprep.subr.bf16.mxu0 %v1450
  %1498 = vmatpush1.bf16.msra.mxu0 %v1447
  %1499 = vmatprep.subr.bf16.mxu0 0
  %1500 = vmatpush1.bf16.msra.mxu0 0
  %1501 = vmatprep.subr.bf16.mxu0 0
  %1502 = vmatpush1.bf16.msra.mxu0 0
  %1503 = vmatprep.subr.bf16.mxu0 0
  %1504 = vmatpush1.bf16.msra.mxu0 0
  %1505 = vmatprep.subr.bf16.mxu0 0
  %1506 = vmatpush1.bf16.msra.mxu0 0
  %1507 = vmatprep.subr.bf16.mxu0 0
  %1508 = vmatpush1.bf16.msra.mxu0 0
  %1509 = vmatprep.subr.bf16.mxu0 0
  %1510 = vmatpush1.bf16.msra.mxu0 0
  %1511 = vmatprep.subr.bf16.mxu0 0
  %1512 = vmatpush1.bf16.msra.mxu0 0
  %1513 = vmatprep.subr.bf16.mxu0 0
  %1514 = vmatpush1.bf16.msra.mxu0 0
  %1515 = vmatprep.subr.bf16.mxu0 0
  %1516 = vmatpush1.bf16.msra.mxu0 0
  %1517 = vmatprep.subr.bf16.mxu0 0
  %1518 = vmatpush1.bf16.msra.mxu0 0
  %1519 = vmatprep.subr.bf16.mxu0 0
  %1520 = vmatpush1.bf16.msra.mxu0 0
  %1521 = vmatprep.subr.bf16.mxu0 0
  %1522 = vmatpush1.bf16.msra.mxu0 0
  %1523 = vmatprep.subr.bf16.mxu0 0
  %1524 = vmatpush1.bf16.msra.mxu0 0
  %1525 = vmatprep.mubr.bf16.mxu0 0
  %1526 = vmatmul.mubr.bf16.gmra.mrb[0].mxu0 %v1438
  %v1527 = vpop.f32.mrb[0].mxu0
  %v1528 = vadd.f32 %v1360, %v1527
  %v1529 = vpop.f32.mrb[0].mxu0
  %v1530 = vadd.f32 %v1360, %v1529
  %v1531 = vpop.f32.mrb[0].mxu0
  %v1532 = vpop.f32.mrb[0].mxu0
  %1533 = vdwg.mxu0
  %v1534 = vsub.f32 0.0, %v1487
  %v1535 = vsub.f32 0.0, %v1489
  %v1536 = vsub.f32 0.0, %v1528
  %v1537 = vsub.f32 0.0, %v1530
  %v1538 = vmul.f32 %v1534, 1.442695
  %v1539 = vpow.pop %v1538
  %v1540 = vmul.f32 %v1535, 1.442695
  %v1541 = vpow.pop %v1540
  %v1542 = vmul.f32 %v1536, 1.442695
  %v1543 = vpow.pop %v1542
  %v1544 = vmul.f32 %v1537, 1.442695
  %v1545 = vpow.pop %v1544
  %v1546 = vadd.f32 %v1539, 1.0
  %v1547 = vadd.f32 %v1541, 1.0
  %v1548 = vadd.f32 %v1543, 1.0
  %v1549 = vadd.f32 %v1545, 1.0
  %v1550 = vrcp.pop %v1546
  %v1551 = vrcp.pop %v1547
  %v1552 = vrcp.pop %v1548
  %v1553 = vrcp.pop %v1549
  %v1554 = vmul.f32 %v1487, %v1550
  %v1555 = vmul.f32 %v1489, %v1551
  %v1556 = vmul.f32 %v1528, %v1552
  %v1557 = vmul.f32 %v1530, %v1553
  %v1562 = vrot.slane %v1554, 4
  %v1563 = vrot.slane %v1555, 4
  %v1564 = vrot.slane %v1556, 4
  %v1565 = vrot.slane %v1557, 4
  %1570 = vst [vmem:[%s5] sm:$0xf0] %v1562
  %1571 = vst [vmem:[%s5 + $0x8] sm:$0xf0] %v1563
  %1572 = vst [vmem:[%s5 + $0x10] sm:$0xf0] %v1564
  %1573 = vst [vmem:[%s5 + $0x18] sm:$0xf0] %v1565
  // Predicated region
  $region22: #{dprc_pallas.1} parent=0 // pred_check
    _
  $region23: #{dprc_pallas.1} parent=0 // pred_check_branch
    %1575 = sbr.rel (0) target = $region25
  $region24: #{dprc_pallas.1} parent=0 // pred_region
    _
  $region25: #{dprc_pallas.1} parent=0 // pred_fallthru
    _
  // Predicated region
  $region26: #{dprc_pallas.1} parent=0 // pred_check
    _
  $region27: #{dprc_pallas.1} parent=0 // pred_check_branch
    %1577 = sbr.rel (0) target = $region29
  $region28: #{dprc_pallas.1} parent=0 // pred_region
    _
  $region29: #{dprc_pallas.1} parent=0 // pred_fallthru
    _

</llo_original>
